<compile_context>
chip_gen: v7x
topology: tpu7x:2x2x1
jax: 0.10.0
libtpu: 0.0.40
codegen_flags: <defaults>
</compile_context>

<pallas_src>
import jax
import jax.numpy as jnp
from jax.experimental import pallas as pl
from jax.experimental.pallas import tpu as pltpu

EPS = 1e-5                      # nn.BatchNorm2d default eps
MATMUL_DTYPE = jnp.bfloat16     # MXU operand dtype; accumulation stays f32
TILE_M = 128                    # rows per grid step (mult. of 8). Sweep
                                # 512-2048 at real ResNet widths; 128 keeps
                                # several grid steps at the toy demo sizes.

_COMPILER_PARAMS = pltpu.CompilerParams(
    dimension_semantics=("parallel",),      # independent M tiles -> both TCs on v7x
    vmem_limit_bytes=64 * 1024 * 1024,      # explicit; tiles sized well below this
)


# -----------------------------------------------------------------------------
# Pallas kernels
# -----------------------------------------------------------------------------
def _conv_stats_kernel(p_ref, w_ref, y_ref, sum_ref, ssq_ref):
    """One fused matmul (K = 9*Cin) + per-tile BN partial statistics."""
    y = jnp.dot(p_ref[...], w_ref[...], preferred_element_type=jnp.float32)
    y_ref[...] = y
    sum_ref[0] = jnp.sum(y, axis=0, keepdims=True)
    ssq_ref[0] = jnp.sum(y * y, axis=0, keepdims=True)


def _conv_stats_down_kernel(p_ref, w_ref, xs_ref, wd_ref,
                            y_ref, sum_ref, ssq_ref, dsum_ref, dssq_ref):
    """conv1 matmul + its stats, plus the 1x1 downsample stats (fused pass 1)."""
    y = jnp.dot(p_ref[...], w_ref[...], preferred_element_type=jnp.float32)
    y_ref[...] = y
    sum_ref[0] = jnp.sum(y, axis=0, keepdims=True)
    ssq_ref[0] = jnp.sum(y * y, axis=0, keepdims=True)
    d = jnp.dot(xs_ref[...], wd_ref[...], preferred_element_type=jnp.float32)
    dsum_ref[0] = jnp.sum(d, axis=0, keepdims=True)
    dssq_ref[0] = jnp.sum(d * d, axis=0, keepdims=True)


def _bn_relu_kernel(y_ref, sc_ref, sh_ref, o_ref):
    """Apply precomputed per-channel scale/shift + ReLU (BN1 epilogue)."""
    o_ref[...] = jnp.maximum(y_ref[...] * sc_ref[...] + sh_ref[...],
                             0.0).astype(o_ref.dtype)


def _bn_add_relu_kernel(y_ref, sc_ref, sh_ref, skip_ref, o_ref):
    """BN2 epilogue + identity residual add + ReLU."""
    y = y_ref[...] * sc_ref[...] + sh_ref[...]
    o_ref[...] = jnp.maximum(y + skip_ref[...], 0.0)


def _bn_down_add_relu_kernel(y_ref, sc_ref, sh_ref, xs_ref, wd_ref,
                             dsc_ref, dsh_ref, o_ref):
    """BN2 epilogue + fused 1x1-downsample-conv skip (+ its BN) + ReLU."""
    y = y_ref[...] * sc_ref[...] + sh_ref[...]
    d = jnp.dot(xs_ref[...], wd_ref[...], preferred_element_type=jnp.float32)
    skip = d * dsc_ref[...] + dsh_ref[...]
    o_ref[...] = jnp.maximum(y + skip, 0.0)


# -----------------------------------------------------------------------------
# pallas_call wrappers (grid over M tiles, all "parallel")
# -----------------------------------------------------------------------------
def _run_conv_stats(patches, w):
    Mp, K = patches.shape
    cout = w.shape[1]
    nt = Mp // TILE_M
    y, s, ss = pl.pallas_call(
        _conv_stats_kernel,
        out_shape=(jax.ShapeDtypeStruct((Mp, cout), jnp.float32),
                   jax.ShapeDtypeStruct((nt, 1, cout), jnp.float32),
                   jax.ShapeDtypeStruct((nt, 1, cout), jnp.float32)),
        grid=(nt,),
        in_specs=[pl.BlockSpec((TILE_M, K), lambda i: (i, 0)),
                  pl.BlockSpec((K, cout), lambda i: (0, 0))],
        out_specs=(pl.BlockSpec((TILE_M, cout), lambda i: (i, 0)),
                   pl.BlockSpec((1, 1, cout), lambda i: (i, 0, 0)),
                   pl.BlockSpec((1, 1, cout), lambda i: (i, 0, 0))),
        compiler_params=_COMPILER_PARAMS,
    )(patches, w)
    return y, s.sum(axis=(0, 1)), ss.sum(axis=(0, 1))


def _run_conv_stats_down(patches, w, xsub, wd):
    Mp, K = patches.shape
    cin = xsub.shape[1]
    cout = w.shape[1]
    nt = Mp // TILE_M
    y, s, ss, ds, dss = pl.pallas_call(
        _conv_stats_down_kernel,
        out_shape=(jax.ShapeDtypeStruct((Mp, cout), jnp.float32),
                   jax.ShapeDtypeStruct((nt, 1, cout), jnp.float32),
                   jax.ShapeDtypeStruct((nt, 1, cout), jnp.float32),
                   jax.ShapeDtypeStruct((nt, 1, cout), jnp.float32),
                   jax.ShapeDtypeStruct((nt, 1, cout), jnp.float32)),
        grid=(nt,),
        in_specs=[pl.BlockSpec((TILE_M, K), lambda i: (i, 0)),
                  pl.BlockSpec((K, cout), lambda i: (0, 0)),
                  pl.BlockSpec((TILE_M, cin), lambda i: (i, 0)),
                  pl.BlockSpec((cin, cout), lambda i: (0, 0))],
        out_specs=(pl.BlockSpec((TILE_M, cout), lambda i: (i, 0)),
                   pl.BlockSpec((1, 1, cout), lambda i: (i, 0, 0)),
                   pl.BlockSpec((1, 1, cout), lambda i: (i, 0, 0)),
                   pl.BlockSpec((1, 1, cout), lambda i: (i, 0, 0)),
                   pl.BlockSpec((1, 1, cout), lambda i: (i, 0, 0))),
        compiler_params=_COMPILER_PARAMS,
    )(patches, w, xsub, wd)
    return (y, s.sum(axis=(0, 1)), ss.sum(axis=(0, 1)),
            ds.sum(axis=(0, 1)), dss.sum(axis=(0, 1)))


def _run_bn_relu(y, scale, shift):
    Mp, c = y.shape
    nt = Mp // TILE_M
    return pl.pallas_call(
        _bn_relu_kernel,
        out_shape=jax.ShapeDtypeStruct((Mp, c), MATMUL_DTYPE),
        grid=(nt,),
        in_specs=[pl.BlockSpec((TILE_M, c), lambda i: (i, 0)),
                  pl.BlockSpec((1, c), lambda i: (0, 0)),
                  pl.BlockSpec((1, c), lambda i: (0, 0))],
        out_specs=pl.BlockSpec((TILE_M, c), lambda i: (i, 0)),
        compiler_params=_COMPILER_PARAMS,
    )(y, scale, shift)


def _run_bn_add_relu(y, scale, shift, skip):
    Mp, c = y.shape
    nt = Mp // TILE_M
    return pl.pallas_call(
        _bn_add_relu_kernel,
        out_shape=jax.ShapeDtypeStruct((Mp, c), jnp.float32),
        grid=(nt,),
        in_specs=[pl.BlockSpec((TILE_M, c), lambda i: (i, 0)),
                  pl.BlockSpec((1, c), lambda i: (0, 0)),
                  pl.BlockSpec((1, c), lambda i: (0, 0)),
                  pl.BlockSpec((TILE_M, c), lambda i: (i, 0))],
        out_specs=pl.BlockSpec((TILE_M, c), lambda i: (i, 0)),
        compiler_params=_COMPILER_PARAMS,
    )(y, scale, shift, skip)


def _run_bn_down_add_relu(y, scale, shift, xsub, wd, dscale, dshift):
    Mp, c = y.shape
    cin = xsub.shape[1]
    nt = Mp // TILE_M
    return pl.pallas_call(
        _bn_down_add_relu_kernel,
        out_shape=jax.ShapeDtypeStruct((Mp, c), jnp.float32),
        grid=(nt,),
        in_specs=[pl.BlockSpec((TILE_M, c), lambda i: (i, 0)),
                  pl.BlockSpec((1, c), lambda i: (0, 0)),
                  pl.BlockSpec((1, c), lambda i: (0, 0)),
                  pl.BlockSpec((TILE_M, cin), lambda i: (i, 0)),
                  pl.BlockSpec((cin, c), lambda i: (0, 0)),
                  pl.BlockSpec((1, c), lambda i: (0, 0)),
                  pl.BlockSpec((1, c), lambda i: (0, 0))],
        out_specs=pl.BlockSpec((TILE_M, c), lambda i: (i, 0)),
        compiler_params=_COMPILER_PARAMS,
    )(y, scale, shift, xsub, wd, dscale, dshift)


# -----------------------------------------------------------------------------
# Glue: layout plumbing (data movement only) and the block wrapper
# -----------------------------------------------------------------------------
def _im2col_3x3(x_nhwc, stride):
    """3x3 / padding=1 conv patches -> (N*Ho*Wo, 9*C), Ho, Wo."""
    N, H, W, C = x_nhwc.shape
    xp = jnp.pad(x_nhwc, ((0, 0), (1, 1), (1, 1), (0, 0)))
    Ho = (H + 2 - 3) // stride + 1
    Wo = (W + 2 - 3) // stride + 1
    taps = []
    for kh in range(3):
        for kw in range(3):
            taps.append(xp[:, kh:kh + stride * (Ho - 1) + 1:stride,
                              kw:kw + stride * (Wo - 1) + 1:stride, :])
    pat = jnp.stack(taps, axis=3)              # (N, Ho, Wo, 9, C)
    return pat.reshape(N * Ho * Wo, 9 * C), Ho, Wo


def _w3x3_to_mat(w):
    """(Cout, Cin, 3, 3) -> (9*Cin, Cout), tap-major to match _im2col_3x3."""
    cout, cin, kh, kw = w.shape
    return jnp.transpose(w, (2, 3, 1, 0)).reshape(kh * kw * cin, cout)


def _pad_rows(a, mult):
    m = a.shape[0]
    mp = ((m + mult - 1) // mult) * mult
    if mp != m:
        a = jnp.pad(a, ((0, mp - m),) + ((0, 0),) * (a.ndim - 1))
    return a


def _bn_scale_shift(s, ss, count, gamma, beta):
    """Fold BN(batch stats) into per-channel scale/shift (done once, in glue)."""
    mean = s / count
    var = jnp.maximum(ss / count - mean * mean, 0.0)       # biased var
    scale = gamma * jax.lax.rsqrt(var + EPS)
    shift = beta - mean * scale
    return (scale.reshape(1, -1).astype(jnp.float32),
            shift.reshape(1, -1).astype(jnp.float32))


def res_block_forward(x_nchw, params):
    """ResBlock forward. x: (N, Cin, H, W) f32 -> (N, Cout, Ho, Wo) f32."""
    N, in_c, H, W = x_nchw.shape
    out_c = params["w1"].shape[0]
    rescale = in_c != out_c
    stride = 2 if rescale else 1

    x = jnp.transpose(x_nchw, (0, 2, 3, 1)).astype(jnp.float32)   # NHWC

    # ---- pass 1: conv1 (one K=9*Cin matmul) + BN1 stats [+ downsample stats]
    p1, Ho, Wo = _im2col_3x3(x, stride)
    M = N * Ho * Wo
    p1 = _pad_rows(p1.astype(MATMUL_DTYPE), TILE_M)
    w1 = _w3x3_to_mat(params["w1"]).astype(MATMUL_DTYPE)

    if rescale:
        xsub = x[:, ::2, ::2, :][:, :Ho, :Wo, :].reshape(M, in_c)
        xsub = _pad_rows(xsub.astype(MATMUL_DTYPE), TILE_M)
        wd = params["wd"].reshape(out_c, in_c).T.astype(MATMUL_DTYPE)
        y1, s1, ss1, ds, dss = _run_conv_stats_down(p1, w1, xsub, wd)
        dsc, dsh = _bn_scale_shift(ds, dss, M, params["gd"], params["bd"])
    else:
        y1, s1, ss1 = _run_conv_stats(p1, w1)

    # ---- pass 2: BN1 + ReLU (per-channel scale/shift precomputed in glue)
    sc1, sh1 = _bn_scale_shift(s1, ss1, M, params["g1"], params["b1"])
    h = _run_bn_relu(y1, sc1, sh1)                      # (Mp, Cout) bf16

    # ---- pass 3: conv2 + BN2 stats
    h_nhwc = h[:M].reshape(N, Ho, Wo, out_c)
    p2, _, _ = _im2col_3x3(h_nhwc, 1)
    p2 = _pad_rows(p2.astype(MATMUL_DTYPE), TILE_M)
    w2 = _w3x3_to_mat(params["w2"]).astype(MATMUL_DTYPE)
    y2, s2, ss2 = _run_conv_stats(p2, w2)
    sc2, sh2 = _bn_scale_shift(s2, ss2, M, params["g2"], params["b2"])

    # ---- pass 4: BN2 + residual add + ReLU (downsample conv fused in-kernel)
    if rescale:
        out = _run_bn_down_add_relu(y2, sc2, sh2, xsub, wd, dsc, dsh)
    else:
        skip = _pad_rows(x.reshape(M, in_c), TILE_M)
        out = _run_bn_add_relu(y2, sc2, sh2, skip)

    out = out[:M].reshape(N, Ho, Wo, out_c)
    return jnp.transpose(out, (0, 3, 1, 2))             # back to NCHW


# -----------------------------------------------------------------------------
# Pure-JAX f32 reference (correctness check only)
# -----------------------------------------------------------------------------
def _ref_forward(x, params, in_c, out_c):
    def conv(x, w, stride, pad):
        return jax.lax.conv_general_dilated(
            x, w, (stride, stride), [(pad, pad), (pad, pad)],
            dimension_numbers=("NCHW", "OIHW", "NCHW"))

    def bn(x, g, b):
        mean = jnp.mean(x, axis=(0, 2, 3), keepdims=True)
        var = jnp.mean((x - mean) ** 2, axis=(0, 2, 3), keepdims=True)
        xh = (x - mean) * jax.lax.rsqrt(var + EPS)
        return xh * g.reshape(1, -1, 1, 1) + b.reshape(1, -1, 1, 1)

    stride = 2 if in_c != out_c else 1
    y = x
    if in_c != out_c:
        y = bn(conv(x, params["wd"], 2, 0), params["gd"], params["bd"])
    h = jax.nn.relu(bn(conv(x, params["w1"], stride, 1),
                       params["g1"], params["b1"]))
    h = bn(conv(h, params["w2"], 1, 1), params["g2"], params["b2"])
    return jax.nn.relu(h + y)


# -----------------------------------------------------------------------------
if __name__ == "__main__":
    key = jax.random.PRNGKey(0)
    N, H, W = 2, 16, 16
    fwd = jax.jit(res_block_forward)

    # exercise both block variants: identity skip (4->4) and downsample (4->8)
    for (in_c, out_c) in [(4, 4), (4, 8)]:
        keys = jax.random.split(key, 8)
        params = {
            "w1": 0.1 * jax.random.normal(keys[0], (out_c, in_c, 3, 3), jnp.float32),
            "w2": 0.1 * jax.random.normal(keys[1], (out_c, out_c, 3, 3), jnp.float32),
            "g1": 1.0 + 0.1 * jax.random.normal(keys[2], (out_c,), jnp.float32),
            "b1": 0.1 * jax.random.normal(keys[3], (out_c,), jnp.float32),
            "g2": 1.0 + 0.1 * jax.random.normal(keys[4], (out_c,), jnp.float32),
            "b2": 0.1 * jax.random.normal(keys[5], (out_c,), jnp.float32),
        }
        if in_c != out_c:
            params["wd"] = 0.1 * jax.random.normal(keys[6], (out_c, in_c, 1, 1), jnp.float32)
            params["gd"] = jnp.ones((out_c,), jnp.float32)
            params["bd"] = jnp.zeros((out_c,), jnp.float32)

        x = jax.random.normal(keys[7], (N, in_c, H, W), jnp.float32)

        out = fwd(x, params)
        jax.block_until_ready(out)

        ref = _ref_forward(x, params, in_c, out_c)
        assert out.shape == ref.shape, (out.shape, ref.shape)
        max_err = float(jnp.max(jnp.abs(out - ref)))
        # bf16 MXU operands -> relaxed tolerance vs the f32 reference
        assert jnp.allclose(out, ref, atol=5e-2, rtol=5e-2), max_err

    print("KERNEL_OK")
</pallas_src>

<mosaic_0001>
module attributes {stable_mosaic.version = 11 : i64} {
  func.func @_conv_stats_kernel(%arg0: i32, %arg1: memref<128x36xbf16, #tpu.memory_space<vmem>>, %arg2: memref<36x4xbf16, #tpu.memory_space<vmem>>, %arg3: memref<128x4xf32, #tpu.memory_space<vmem>>, %arg4: memref<1x1x4xf32, #tpu.memory_space<vmem>>, %arg5: memref<1x1x4xf32, #tpu.memory_space<vmem>>) attributes {dimension_semantics = [#tpu.dimension_semantics<parallel>], iteration_bounds = array<i64: 4>, scalar_prefetch = 0 : i64, scratch_operands = 0 : i64, tpu.core_type = #tpu.core_type<tc>, window_params = [{transform_indices = @transform_0, window_bounds = array<i64: 128, 36>}, {pipeline_mode = #tpu.pipeline_mode<synchronous>, transform_indices = @transform_1, window_bounds = array<i64: 36, 4>}, {transform_indices = @transform_2, window_bounds = array<i64: 128, 4>}, {transform_indices = @transform_3, window_bounds = array<i64: 1, 1, 4>}, {transform_indices = @transform_4, window_bounds = array<i64: 1, 1, 4>}]} {
    %c0 = arith.constant 0 : index
    %c0_0 = arith.constant 0 : index
    %0 = vector.load %arg1[%c0, %c0_0] : memref<128x36xbf16, #tpu.memory_space<vmem>>, vector<128x36xbf16>
    %c0_1 = arith.constant 0 : index
    %c0_2 = arith.constant 0 : index
    %1 = vector.load %arg2[%c0_1, %c0_2] : memref<36x4xbf16, #tpu.memory_space<vmem>>, vector<36x4xbf16>
    %cst = arith.constant dense<0.000000e+00> : vector<128x4xf32>
    %2 = tpu.matmul %0, %1, %cst {dimension_numbers = #tpu.dot_dimension_numbers<[1], [0], [0], [1], [0, 0, 1, 1], [], []>} : vector<128x36xbf16>, vector<36x4xbf16>, vector<128x4xf32> -> vector<128x4xf32>
    %c0_3 = arith.constant 0 : index
    %c0_4 = arith.constant 0 : index
    %3 = vector.load %arg3[%c0_3, %c0_4] : memref<128x4xf32, #tpu.memory_space<vmem>>, vector<128x4xf32>
    tpu.vector_store %arg3[%c0_3, %c0_4], %2 {strides = array<i32>} : memref<128x4xf32, #tpu.memory_space<vmem>>, vector<128x4xf32>,
    %cst_5 = arith.constant dense<0.000000e+00> : vector<4xf32>
    %4 = vector.multi_reduction <add>, %2, %cst_5 [0] : vector<128x4xf32> to vector<4xf32>
    %5 = vector.shape_cast %4 : vector<4xf32> to vector<1x4xf32>
    %c0_6 = arith.constant 0 : index
    %c0_7 = arith.constant 0 : index
    %c0_8 = arith.constant 0 : index
    %6 = vector.load %arg4[%c0_6, %c0_7, %c0_8] : memref<1x1x4xf32, #tpu.memory_space<vmem>>, vector<1x1x4xf32>
    %7 = vector.shape_cast %6 : vector<1x1x4xf32> to vector<1x4xf32>
    %8 = vector.shape_cast %5 : vector<1x4xf32> to vector<1x1x4xf32>
    tpu.vector_store %arg4[%c0_6, %c0_7, %c0_8], %8 {strides = array<i32>} : memref<1x1x4xf32, #tpu.memory_space<vmem>>, vector<1x1x4xf32>,
    %9 = arith.mulf %2, %2 : vector<128x4xf32>
    %cst_9 = arith.constant dense<0.000000e+00> : vector<4xf32>
    %10 = vector.multi_reduction <add>, %9, %cst_9 [0] : vector<128x4xf32> to vector<4xf32>
    %11 = vector.shape_cast %10 : vector<4xf32> to vector<1x4xf32>
    %c0_10 = arith.constant 0 : index
    %c0_11 = arith.constant 0 : index
    %c0_12 = arith.constant 0 : index
    %12 = vector.load %arg5[%c0_10, %c0_11, %c0_12] : memref<1x1x4xf32, #tpu.memory_space<vmem>>, vector<1x1x4xf32>
    %13 = vector.shape_cast %12 : vector<1x1x4xf32> to vector<1x4xf32>
    %14 = vector.shape_cast %11 : vector<1x4xf32> to vector<1x1x4xf32>
    tpu.vector_store %arg5[%c0_10, %c0_11, %c0_12], %14 {strides = array<i32>} : memref<1x1x4xf32, #tpu.memory_space<vmem>>, vector<1x1x4xf32>,
    return
  }
  func.func @transform_0(%arg0: i32) -> (i32, i32) {
    %c0_i32 = arith.constant 0 : i32
    %c0_i32_0 = arith.constant 0 : i32
    return %arg0, %c0_i32 : i32, i32
  }
  func.func @transform_1(%arg0: i32) -> (i32, i32) {
    %c0_i32 = arith.constant 0 : i32
    %c0_i32_0 = arith.constant 0 : i32
    %c0_i32_1 = arith.constant 0 : i32
    return %c0_i32, %c0_i32_0 : i32, i32
  }
  func.func @transform_2(%arg0: i32) -> (i32, i32) {
    %c0_i32 = arith.constant 0 : i32
    %c0_i32_0 = arith.constant 0 : i32
    return %arg0, %c0_i32 : i32, i32
  }
  func.func @transform_3(%arg0: i32) -> (i32, i32, i32) {
    %c0_i32 = arith.constant 0 : i32
    %c0_i32_0 = arith.constant 0 : i32
    %c0_i32_1 = arith.constant 0 : i32
    return %arg0, %c0_i32, %c0_i32_0 : i32, i32, i32
  }
  func.func @transform_4(%arg0: i32) -> (i32, i32, i32) {
    %c0_i32 = arith.constant 0 : i32
    %c0_i32_0 = arith.constant 0 : i32
    %c0_i32_1 = arith.constant 0 : i32
    return %arg0, %c0_i32, %c0_i32_0 : i32, i32, i32
  }
}

module attributes {stable_mosaic.version = 11 : i64} {
  func.func @_bn_relu_kernel(%arg0: i32, %arg1: memref<128x4xf32, #tpu.memory_space<vmem>>, %arg2: memref<1x4xf32, #tpu.memory_space<vmem>>, %arg3: memref<1x4xf32, #tpu.memory_space<vmem>>, %arg4: memref<128x4xbf16, #tpu.memory_space<vmem>>) attributes {dimension_semantics = [#tpu.dimension_semantics<parallel>], iteration_bounds = array<i64: 4>, scalar_prefetch = 0 : i64, scratch_operands = 0 : i64, tpu.core_type = #tpu.core_type<tc>, window_params = [{transform_indices = @transform_0, window_bounds = array<i64: 128, 4>}, {pipeline_mode = #tpu.pipeline_mode<synchronous>, transform_indices = @transform_1, window_bounds = array<i64: 1, 4>}, {pipeline_mode = #tpu.pipeline_mode<synchronous>, transform_indices = @transform_2, window_bounds = array<i64: 1, 4>}, {transform_indices = @transform_3, window_bounds = array<i64: 128, 4>}]} {
    %c0 = arith.constant 0 : index
    %c0_0 = arith.constant 0 : index
    %0 = vector.load %arg1[%c0, %c0_0] : memref<128x4xf32, #tpu.memory_space<vmem>>, vector<128x4xf32>
    %c0_1 = arith.constant 0 : index
    %c0_2 = arith.constant 0 : index
    %1 = vector.load %arg2[%c0_1, %c0_2] : memref<1x4xf32, #tpu.memory_space<vmem>>, vector<1x4xf32>
    %2 = vector.broadcast %1 : vector<1x4xf32> to vector<128x4xf32>
    %3 = arith.mulf %0, %2 : vector<128x4xf32>
    %c0_3 = arith.constant 0 : index
    %c0_4 = arith.constant 0 : index
    %4 = vector.load %arg3[%c0_3, %c0_4] : memref<1x4xf32, #tpu.memory_space<vmem>>, vector<1x4xf32>
    %5 = vector.broadcast %4 : vector<1x4xf32> to vector<128x4xf32>
    %6 = arith.addf %3, %5 : vector<128x4xf32>
    %cst = arith.constant 0.000000e+00 : f32
    %7 = vector.broadcast %cst : f32 to vector<128x4xf32>
    %8 = arith.maximumf %6, %7 : vector<128x4xf32>
    %9 = arith.truncf %8 : vector<128x4xf32> to vector<128x4xbf16>
    %c0_5 = arith.constant 0 : index
    %c0_6 = arith.constant 0 : index
    %10 = vector.load %arg4[%c0_5, %c0_6] : memref<128x4xbf16, #tpu.memory_space<vmem>>, vector<128x4xbf16>
    tpu.vector_store %arg4[%c0_5, %c0_6], %9 {strides = array<i32>} : memref<128x4xbf16, #tpu.memory_space<vmem>>, vector<128x4xbf16>,
    return
  }
  func.func @transform_0(%arg0: i32) -> (i32, i32) {
    %c0_i32 = arith.constant 0 : i32
    %c0_i32_0 = arith.constant 0 : i32
    return %arg0, %c0_i32 : i32, i32
  }
  func.func @transform_1(%arg0: i32) -> (i32, i32) {
    %c0_i32 = arith.constant 0 : i32
    %c0_i32_0 = arith.constant 0 : i32
    %c0_i32_1 = arith.constant 0 : i32
    return %c0_i32, %c0_i32_0 : i32, i32
  }
  func.func @transform_2(%arg0: i32) -> (i32, i32) {
    %c0_i32 = arith.constant 0 : i32
    %c0_i32_0 = arith.constant 0 : i32
    %c0_i32_1 = arith.constant 0 : i32
    return %c0_i32, %c0_i32_0 : i32, i32
  }
  func.func @transform_3(%arg0: i32) -> (i32, i32) {
    %c0_i32 = arith.constant 0 : i32
    %c0_i32_0 = arith.constant 0 : i32
    return %arg0, %c0_i32 : i32, i32
  }
}

module attributes {stable_mosaic.version = 11 : i64} {
  func.func @_bn_add_relu_kernel(%arg0: i32, %arg1: memref<128x4xf32, #tpu.memory_space<vmem>>, %arg2: memref<1x4xf32, #tpu.memory_space<vmem>>, %arg3: memref<1x4xf32, #tpu.memory_space<vmem>>, %arg4: memref<128x4xf32, #tpu.memory_space<vmem>>, %arg5: memref<128x4xf32, #tpu.memory_space<vmem>>) attributes {dimension_semantics = [#tpu.dimension_semantics<parallel>], iteration_bounds = array<i64: 4>, scalar_prefetch = 0 : i64, scratch_operands = 0 : i64, tpu.core_type = #tpu.core_type<tc>, window_params = [{transform_indices = @transform_0, window_bounds = array<i64: 128, 4>}, {pipeline_mode = #tpu.pipeline_mode<synchronous>, transform_indices = @transform_1, window_bounds = array<i64: 1, 4>}, {pipeline_mode = #tpu.pipeline_mode<synchronous>, transform_indices = @transform_2, window_bounds = array<i64: 1, 4>}, {transform_indices = @transform_3, window_bounds = array<i64: 128, 4>}, {transform_indices = @transform_4, window_bounds = array<i64: 128, 4>}]} {
    %c0 = arith.constant 0 : index
    %c0_0 = arith.constant 0 : index
    %0 = vector.load %arg1[%c0, %c0_0] : memref<128x4xf32, #tpu.memory_space<vmem>>, vector<128x4xf32>
    %c0_1 = arith.constant 0 : index
    %c0_2 = arith.constant 0 : index
    %1 = vector.load %arg2[%c0_1, %c0_2] : memref<1x4xf32, #tpu.memory_space<vmem>>, vector<1x4xf32>
    %2 = vector.broadcast %1 : vector<1x4xf32> to vector<128x4xf32>
    %3 = arith.mulf %0, %2 : vector<128x4xf32>
    %c0_3 = arith.constant 0 : index
    %c0_4 = arith.constant 0 : index
    %4 = vector.load %arg3[%c0_3, %c0_4] : memref<1x4xf32, #tpu.memory_space<vmem>>, vector<1x4xf32>
    %5 = vector.broadcast %4 : vector<1x4xf32> to vector<128x4xf32>
    %6 = arith.addf %3, %5 : vector<128x4xf32>
    %c0_5 = arith.constant 0 : index
    %c0_6 = arith.constant 0 : index
    %7 = vector.load %arg4[%c0_5, %c0_6] : memref<128x4xf32, #tpu.memory_space<vmem>>, vector<128x4xf32>
    %8 = arith.addf %6, %7 : vector<128x4xf32>
    %cst = arith.constant 0.000000e+00 : f32
    %9 = vector.broadcast %cst : f32 to vector<128x4xf32>
    %10 = arith.maximumf %8, %9 : vector<128x4xf32>
    %c0_7 = arith.constant 0 : index
    %c0_8 = arith.constant 0 : index
    %11 = vector.load %arg5[%c0_7, %c0_8] : memref<128x4xf32, #tpu.memory_space<vmem>>, vector<128x4xf32>
    tpu.vector_store %arg5[%c0_7, %c0_8], %10 {strides = array<i32>} : memref<128x4xf32, #tpu.memory_space<vmem>>, vector<128x4xf32>,
    return
  }
  func.func @transform_0(%arg0: i32) -> (i32, i32) {
    %c0_i32 = arith.constant 0 : i32
    %c0_i32_0 = arith.constant 0 : i32
    return %arg0, %c0_i32 : i32, i32
  }
  func.func @transform_1(%arg0: i32) -> (i32, i32) {
    %c0_i32 = arith.constant 0 : i32
    %c0_i32_0 = arith.constant 0 : i32
    %c0_i32_1 = arith.constant 0 : i32
    return %c0_i32, %c0_i32_0 : i32, i32
  }
  func.func @transform_2(%arg0: i32) -> (i32, i32) {
    %c0_i32 = arith.constant 0 : i32
    %c0_i32_0 = arith.constant 0 : i32
    %c0_i32_1 = arith.constant 0 : i32
    return %c0_i32, %c0_i32_0 : i32, i32
  }
  func.func @transform_3(%arg0: i32) -> (i32, i32) {
    %c0_i32 = arith.constant 0 : i32
    %c0_i32_0 = arith.constant 0 : i32
    return %arg0, %c0_i32 : i32, i32
  }
  func.func @transform_4(%arg0: i32) -> (i32, i32) {
    %c0_i32 = arith.constant 0 : i32
    %c0_i32_0 = arith.constant 0 : i32
    return %arg0, %c0_i32 : i32, i32
  }
}

</mosaic_0001>

<llo_original>
// kernel: res_block_forward.5
$region0: #{res_block_forward.5}
  #allocation0 [shape = 'u32[]', space=smem, size = 0x4, offset = 0x4, fixed_abs, tag = 'smem constant byte address 0x4 - core index']
  #allocation1 [shape = 'u32[144,128]{1,0:T(1,128)}', space=vmem, size = 0x12000, scoped, tag = 'internal scratch']
  %s0 = inlined_call_operand.hbm [shape: f32[512,4], index: 0, kind: input, shape index: {}]
  %s1 = inlined_call_operand.hbm [shape: f32[1,4], index: 1, kind: input, shape index: {}]
  %s2 = inlined_call_operand.hbm [shape: f32[1,4], index: 2, kind: input, shape index: {}]
  %s3 = inlined_call_operand.hbm [shape: bf16[512,4], index: 3, kind: output, shape index: {}]
  %s4 = sld [smem:[#allocation0]]
  $region57: #{res_block_forward.5} parent=0
    _
  %s6 = ssub.s32 1, %s4
  %s7 = scalar_select 0, %s6, %s4
  $region1: #{res_block_forward.5} parent=0
    #allocation2 [shape = 'u8[131072]{0}', space=vmem, size = 0x20000, scoped, tag = 'input window, operand 0']
    #allocation3 [shape = 's32[2]{0}', space=sflag, size = 0x8, scoped, tag = 'scoped memory for res_block_forward.5']
    #allocation4 [shape = 's32[2]{0}', space=sflag, size = 0x8, scoped, tag = 'scoped memory for res_block_forward.5']
    #allocation5 [shape = 'u8[512]{0}', space=vmem, size = 0x400, scoped, tag = 'input window, operand 1, single buffered']
    #allocation6 [shape = 's32[1]{0}', space=sflag, size = 0x4, scoped, tag = 'scoped memory for res_block_forward.5']
    #allocation7 [shape = 'u8[512]{0}', space=vmem, size = 0x400, scoped, tag = 'input window, operand 2, single buffered']
    #allocation8 [shape = 'u8[65536]{0}', space=vmem, size = 0x10000, scoped, tag = 'output window, operand 0']
    %8 = vsyncpa [#allocation3], 0
    %s9 = scalar_lea.sflag [#allocation3], 1
    %10 = vsyncpa %s9, 0
    %11 = vsyncpa [#allocation6], 0
    %12 = vsyncpa [#allocation4], 0
    %s13 = scalar_lea.sflag [#allocation4], 1
    %14 = vsyncpa %s13, 0
    loop: start=0, step=1, limit=6
    $region2: #{res_block_forward.5} parent=1 // loop_pre_header
      _
    $region3: #{res_block_forward.5} parent=1 // loop_header
      %s16 = sphi 0, %s20
      %p17 = scmp.ge.s32.totalorder %s16, 6
      %s26 = sphi 0, %s28
      %s29 = sphi 0, %s26
      %s30 = sphi 0, %s29
      %s46 = sphi 0, %s30
      %s50 = sphi 0, %s50
      %s52 = sphi 0, %s50
      %s53 = sphi 0, %s52
      %s67 = sphi 0, %s53
      %s71 = sphi 0, %s71
      %s73 = sphi 0, %s71
      %s74 = sphi 0, %s73
      %s88 = sphi 0, %s74
      %s94 = sphi 0, %s96
      %s97 = sphi 0, %s94
      %s98 = sphi 0, %s97
      %s114 = sphi 0, %s98
    $region4: #{res_block_forward.5} parent=1 // loop_header_branch
      %19 = sbr.rel (%p17) target = $region8
    $region5: #{res_block_forward.5} parent=1 // loop_body
      %s21 = ssub.s32 %s16, 1
      %s22 = ssub.s32 %s16, 2
      %s23 = sadd.s32 %s16, 1
      %s24 = ssub.s32 %s16, %s23
      %p25 = scmp.eq.s32.totalorder %s24, 0
      %s27 = sadd.s32 %s26, 1
      %s28 = scalar_select %p25, %s26, %s27
      %p31 = pneg %p25
      %p32 = scmp.eq.s32.totalorder %s16, 3
      %p33 = por %p31, %p32
      %p34 = scmp.ne.s32.totalorder %s26, %s29
      %p35 = scmp.eq.s32.totalorder %s16, 0
      %p36 = por %p34, %p35
      %p37 = scmp.ne.s32.totalorder %s26, %s29
      %p38 = scmp.eq.s32.totalorder %s21, 3
      %p39 = por %p37, %p38
      %p40 = scmp.ne.s32.totalorder %s29, %s30
      %p41 = scmp.eq.s32.totalorder %s21, 0
      %p42 = por %p40, %p41
      %p43 = scmp.ne.s32.totalorder %s29, %s30
      %p44 = scmp.eq.s32.totalorder %s22, 3
      %p45 = por %p43, %p44
      %p47 = scmp.ne.s32.totalorder %s30, %s46
      %p48 = scmp.eq.s32.totalorder %s22, 0
      %p49 = por %p47, %p48
      %s51 = sadd.s32 %s50, 1
      %p54 = scmp.eq.s32.totalorder %s16, 3
      %p55 = scmp.ne.s32.totalorder %s50, %s52
      %p56 = scmp.eq.s32.totalorder %s16, 0
      %p57 = por %p55, %p56
      %p58 = scmp.ne.s32.totalorder %s50, %s52
      %p59 = scmp.eq.s32.totalorder %s21, 3
      %p60 = por %p58, %p59
      %p61 = scmp.ne.s32.totalorder %s52, %s53
      %p62 = scmp.eq.s32.totalorder %s21, 0
      %p63 = por %p61, %p62
      %p64 = scmp.ne.s32.totalorder %s52, %s53
      %p65 = scmp.eq.s32.totalorder %s22, 3
      %p66 = por %p64, %p65
      %p68 = scmp.ne.s32.totalorder %s53, %s67
      %p69 = scmp.eq.s32.totalorder %s22, 0
      %p70 = por %p68, %p69
      %s72 = sadd.s32 %s71, 1
      %p75 = scmp.eq.s32.totalorder %s16, 3
      %p76 = scmp.ne.s32.totalorder %s71, %s73
      %p77 = scmp.eq.s32.totalorder %s16, 0
      %p78 = por %p76, %p77
      %p79 = scmp.ne.s32.totalorder %s71, %s73
      %p80 = scmp.eq.s32.totalorder %s21, 3
      %p81 = por %p79, %p80
      %p82 = scmp.ne.s32.totalorder %s73, %s74
      %p83 = scmp.eq.s32.totalorder %s21, 0
      %p84 = por %p82, %p83
      %p85 = scmp.ne.s32.totalorder %s73, %s74
      %p86 = scmp.eq.s32.totalorder %s22, 3
      %p87 = por %p85, %p86
      %p89 = scmp.ne.s32.totalorder %s74, %s88
      %p90 = scmp.eq.s32.totalorder %s22, 0
      %p91 = por %p89, %p90
      %s92 = ssub.s32 %s16, %s23
      %p93 = scmp.eq.s32.totalorder %s92, 0
      %s95 = sadd.s32 %s94, 1
      %s96 = scalar_select %p93, %s94, %s95
      %p99 = pneg %p93
      %p100 = scmp.eq.s32.totalorder %s16, 3
      %p101 = por %p99, %p100
      %p102 = scmp.ne.s32.totalorder %s94, %s97
      %p103 = scmp.eq.s32.totalorder %s16, 0
      %p104 = por %p102, %p103
      %p105 = scmp.ne.s32.totalorder %s94, %s97
      %p106 = scmp.eq.s32.totalorder %s21, 3
      %p107 = por %p105, %p106
      %p108 = scmp.ne.s32.totalorder %s97, %s98
      %p109 = scmp.eq.s32.totalorder %s21, 0
      %p110 = por %p108, %p109
      %p111 = scmp.ne.s32.totalorder %s97, %s98
      %p112 = scmp.eq.s32.totalorder %s22, 3
      %p113 = por %p111, %p112
      %p115 = scmp.ne.s32.totalorder %s98, %s114
      %p116 = scmp.eq.s32.totalorder %s22, 0
      %p117 = por %p115, %p116
      %p118 = scmp.le.s32.totalorder 1, %s16
      %p119 = scmp.lt.s32.totalorder %s16, 5
      %p120 = pnand %p118, %p119
      %p121 = pneg %p120
      // Predicated region
      $region9: #{res_block_forward.5} parent=5 // pred_check
        _
      $region10: #{res_block_forward.5} parent=5 // pred_check_branch
        %123 = sbr.rel (%p120) target = $region12
      $region11: #{res_block_forward.5} parent=5 // pred_region
        %s124 = ssub.s32 %s16, 1
        // Predicated region
        $region13: #{res_block_forward.5} parent=11 // pred_check
          %p125 = pneg %p63
        $region14: #{res_block_forward.5} parent=11 // pred_check_branch
          %127 = sbr.rel (%p125) target = $region16
        $region15: #{res_block_forward.5} parent=11 // pred_region
          %s129 = ssub.s32 16, 16
          %130 = vsyncadd [#allocation6], %s129
          %s132 = sshll.u32 [#allocation5], 4
          %s133 = int_to_ptr.vmem [resolvable:$true] %s132
          %135 = dma.hbm_to_vmem [thread:$0]  %s1, 16, %s133, [#allocation6]
        $region16: #{res_block_forward.5} parent=11 // pred_fallthru
          _
        // Predicated region
        $region17: #{res_block_forward.5} parent=11 // pred_check
          %p136 = pneg %p84
        $region18: #{res_block_forward.5} parent=11 // pred_check_branch
          %138 = sbr.rel (%p136) target = $region20
        $region19: #{res_block_forward.5} parent=11 // pred_region
          %s140 = ssub.s32 16, 16
          %141 = vsyncadd [#allocation6], %s140
          %s143 = sshll.u32 [#allocation7], 4
          %s144 = int_to_ptr.vmem [resolvable:$true] %s143
          %146 = dma.hbm_to_vmem [thread:$0]  %s2, 16, %s144, [#allocation6]
        $region20: #{res_block_forward.5} parent=11 // pred_fallthru
          _
      $region12: #{res_block_forward.5} parent=5 // pred_fallthru
        _
      %p147 = scmp.lt.s32.totalorder %s16, 4
      // Predicated region
      $region21: #{res_block_forward.5} parent=5 // pred_check
        %p148 = pneg %p147
      $region22: #{res_block_forward.5} parent=5 // pred_check_branch
        %150 = sbr.rel (%p148) target = $region24
      $region23: #{res_block_forward.5} parent=5 // pred_region
        // Predicated region
        $region25: #{res_block_forward.5} parent=23 // pred_check
          %p151 = pneg %p36
        $region26: #{res_block_forward.5} parent=23 // pred_check_branch
          %153 = sbr.rel (%p151) target = $region28
        $region27: #{res_block_forward.5} parent=23 // pred_region
          %s154 = sand.u32 %s26, 1
          %s155 = scalar_lea.sflag [#allocation3], %s154
          %s156 = sand.u32 %s26, 1
          %s157 = smul.addr %s156, 128
          %s158 = scalar_lea.vmem [#allocation2], %s157
          %s159 = smul.u32 16, %s16
          %s161 = ssub.s32 2048, 2048
          %162 = vsyncadd %s155, %s161
          %s163 = smul.addr %s159, 128
          %s164 = scalar_lea.hbm %s0, %s163
          %s165 = sshll.u32 %s158, 4
          %s166 = int_to_ptr.vmem [resolvable:$true] %s165
          %171 = dma.hbm_to_vmem [thread:$0]  %s164, 2048, %s166, %s155, 128, 128, 8
        $region28: #{res_block_forward.5} parent=23 // pred_fallthru
          _
      $region24: #{res_block_forward.5} parent=5 // pred_fallthru
        _
      %p172 = scmp.le.s32.totalorder 1, %s16
      %p173 = scmp.lt.s32.totalorder %s16, 5
      %p174 = pnand %p172, %p173
      %p175 = pneg %p174
      // Predicated region
      $region29: #{res_block_forward.5} parent=5 // pred_check
        _
      $region30: #{res_block_forward.5} parent=5 // pred_check_branch
        %177 = sbr.rel (%p174) target = $region32
      $region31: #{res_block_forward.5} parent=5 // pred_region
        %s178 = ssub.s32 %s16, 1
        %s179 = sand.u32 %s29, 1
        %s180 = scalar_lea.sflag [#allocation3], %s179
        %s181 = sand.u32 %s29, 1
        %s182 = smul.addr %s181, 128
        %s183 = scalar_lea.vmem [#allocation2], %s182
        // Predicated region
        $region33: #{res_block_forward.5} parent=31 // pred_check
          %p184 = pneg %p42
        $region34: #{res_block_forward.5} parent=31 // pred_check_branch
          %186 = sbr.rel (%p184) target = $region36
        $region35: #{res_block_forward.5} parent=31 // pred_region
          %187 = dma.done %s180, 2048
        $region36: #{res_block_forward.5} parent=31 // pred_fallthru
          _
        // Predicated region
        $region37: #{res_block_forward.5} parent=31 // pred_check
          %p188 = pneg %p63
        $region38: #{res_block_forward.5} parent=31 // pred_check_branch
          %190 = sbr.rel (%p188) target = $region40
        $region39: #{res_block_forward.5} parent=31 // pred_region
          %191 = dma.done [#allocation6], 16
        $region40: #{res_block_forward.5} parent=31 // pred_fallthru
          _
        // Predicated region
        $region41: #{res_block_forward.5} parent=31 // pred_check
          %p192 = pneg %p84
        $region42: #{res_block_forward.5} parent=31 // pred_check_branch
          %194 = sbr.rel (%p192) target = $region44
        $region43: #{res_block_forward.5} parent=31 // pred_region
          %195 = dma.done [#allocation6], 16
        $region44: #{res_block_forward.5} parent=31 // pred_fallthru
          _
        %s196 = sand.u32 %s29, 1
        %s197 = scalar_lea.sflag [#allocation3], %s196
        %s198 = sand.u32 %s29, 1
        %s199 = smul.addr %s198, 128
        %s200 = scalar_lea.vmem [#allocation2], %s199
        %p201 = pneg %p42
        %p202 = pneg %p39
        %p203 = pneg %p63
        %p204 = pneg %p60
        %p205 = pneg %p84
        %p206 = pneg %p81
        %p207 = pneg %p110
        %p208 = pneg %p107
        %s209 = sand.u32 %s97, 1
        %s210 = scalar_lea.sflag [#allocation4], %s209
        %s211 = sand.u32 %s97, 1
        %s212 = smul.addr %s211, 64
        %s213 = scalar_lea.vmem [#allocation8], %s212
        %s214 = smul.u32 16, %s21
        %s215 = smul.u32 16, %s21
        %v216 = vld [vmem:[%s183] sm:$0xff]
        %v217 = vld [vmem:[%s183 + $0x8] sm:$0xff]
        %v218 = vld [vmem:[%s183 + $0x10] sm:$0xff]
        %v219 = vld [vmem:[%s183 + $0x18] sm:$0xff]
        %v220 = vld [vmem:[%s183 + $0x20] sm:$0xff]
        %v221 = vld [vmem:[%s183 + $0x28] sm:$0xff]
        %v222 = vld [vmem:[%s183 + $0x30] sm:$0xff]
        %v223 = vld [vmem:[%s183 + $0x38] sm:$0xff]
        %v224 = vld [vmem:[%s183 + $0x40] sm:$0xff]
        %v225 = vld [vmem:[%s183 + $0x48] sm:$0xff]
        %v226 = vld [vmem:[%s183 + $0x50] sm:$0xff]
        %v227 = vld [vmem:[%s183 + $0x58] sm:$0xff]
        %v228 = vld [vmem:[%s183 + $0x60] sm:$0xff]
        %v229 = vld [vmem:[%s183 + $0x68] sm:$0xff]
        %v230 = vld [vmem:[%s183 + $0x70] sm:$0xff]
        %v231 = vld [vmem:[%s183 + $0x78] sm:$0xff]
        %v232 = vld [vmem:[#allocation5] sm:$0x1]
        %v234 = vlaneseq
        %v235 = vshrl.u32 %v234, 7
        %v236 = vsub.s32 0, %v235
        %v237 = vrot.slane %v232, %v236
        %v239 = vmul.f32 %v216, %v237
        %v240 = vmul.f32 %v217, %v237
        %v241 = vmul.f32 %v218, %v237
        %v242 = vmul.f32 %v219, %v237
        %v243 = vmul.f32 %v220, %v237
        %v244 = vmul.f32 %v221, %v237
        %v245 = vmul.f32 %v222, %v237
        %v246 = vmul.f32 %v223, %v237
        %v247 = vmul.f32 %v224, %v237
        %v248 = vmul.f32 %v225, %v237
        %v249 = vmul.f32 %v226, %v237
        %v250 = vmul.f32 %v227, %v237
        %v251 = vmul.f32 %v228, %v237
        %v252 = vmul.f32 %v229, %v237
        %v253 = vmul.f32 %v230, %v237
        %v254 = vmul.f32 %v231, %v237
        %v255 = vld [vmem:[#allocation7] sm:$0x1]
        %v257 = vlaneseq
        %v258 = vshrl.u32 %v257, 7
        %v259 = vsub.s32 0, %v258
        %v260 = vrot.slane %v255, %v259
        %v262 = vadd.f32 %v239, %v260
        %v263 = vadd.f32 %v240, %v260
        %v264 = vadd.f32 %v241, %v260
        %v265 = vadd.f32 %v242, %v260
        %v266 = vadd.f32 %v243, %v260
        %v267 = vadd.f32 %v244, %v260
        %v268 = vadd.f32 %v245, %v260
        %v269 = vadd.f32 %v246, %v260
        %v270 = vadd.f32 %v247, %v260
        %v271 = vadd.f32 %v248, %v260
        %v272 = vadd.f32 %v249, %v260
        %v273 = vadd.f32 %v250, %v260
        %v274 = vadd.f32 %v251, %v260
        %v275 = vadd.f32 %v252, %v260
        %v276 = vadd.f32 %v253, %v260
        %v277 = vadd.f32 %v254, %v260
        %v278 = vmax.f32 %v262, 0.0
        %v279 = vmax.f32 %v263, 0.0
        %v280 = vmax.f32 %v264, 0.0
        %v281 = vmax.f32 %v265, 0.0
        %v282 = vmax.f32 %v266, 0.0
        %v283 = vmax.f32 %v267, 0.0
        %v284 = vmax.f32 %v268, 0.0
        %v285 = vmax.f32 %v269, 0.0
        %v286 = vmax.f32 %v270, 0.0
        %v287 = vmax.f32 %v271, 0.0
        %v288 = vmax.f32 %v272, 0.0
        %v289 = vmax.f32 %v273, 0.0
        %v290 = vmax.f32 %v274, 0.0
        %v291 = vmax.f32 %v275, 0.0
        %v292 = vmax.f32 %v276, 0.0
        %v293 = vmax.f32 %v277, 0.0
        %v294 = vpack.c.bf16 %v279, %v278
        %v295 = vpack.c.bf16 %v281, %v280
        %v296 = vpack.c.bf16 %v283, %v282
        %v297 = vpack.c.bf16 %v285, %v284
        %v298 = vpack.c.bf16 %v287, %v286
        %v299 = vpack.c.bf16 %v289, %v288
        %v300 = vpack.c.bf16 %v291, %v290
        %v301 = vpack.c.bf16 %v293, %v292
        %v310 = vunpack.c.l.b16 %v294
        %v311 = vunpack.c.h.b16 %v294
        %v312 = vunpack.c.l.b16 %v295
        %v313 = vunpack.c.h.b16 %v295
        %v314 = vunpack.c.l.b16 %v296
        %v315 = vunpack.c.h.b16 %v296
        %v316 = vunpack.c.l.b16 %v297
        %v317 = vunpack.c.h.b16 %v297
        %v318 = vunpack.c.l.b16 %v298
        %v319 = vunpack.c.h.b16 %v298
        %v320 = vunpack.c.l.b16 %v299
        %v321 = vunpack.c.h.b16 %v299
        %v322 = vunpack.c.l.b16 %v300
        %v323 = vunpack.c.h.b16 %v300
        %v324 = vunpack.c.l.b16 %v301
        %v325 = vunpack.c.h.b16 %v301
        %v326 = vpack.c.b16 %v310, %v310
        %v327 = vpack.c.b16 %v311, %v311
        %v328 = vpack.c.b16 %v312, %v312
        %v329 = vpack.c.b16 %v313, %v313
        %v330 = vpack.c.b16 %v314, %v314
        %v331 = vpack.c.b16 %v315, %v315
        %v332 = vpack.c.b16 %v316, %v316
        %v333 = vpack.c.b16 %v317, %v317
        %v334 = vpack.c.b16 %v318, %v318
        %v335 = vpack.c.b16 %v319, %v319
        %v336 = vpack.c.b16 %v320, %v320
        %v337 = vpack.c.b16 %v321, %v321
        %v338 = vpack.c.b16 %v322, %v322
        %v339 = vpack.c.b16 %v323, %v323
        %v340 = vpack.c.b16 %v324, %v324
        %v341 = vpack.c.b16 %v325, %v325
        %vm358 = vcmask 27648
        %359 = vst.msk [vmem:[%s213] sm:$0xf] %vm358, %v326
        %360 = vst.msk [vmem:[%s213 + $0x4] sm:$0xf] %vm358, %v327
        %361 = vst.msk [vmem:[%s213 + $0x8] sm:$0xf] %vm358, %v328
        %362 = vst.msk [vmem:[%s213 + $0xc] sm:$0xf] %vm358, %v329
        %363 = vst.msk [vmem:[%s213 + $0x10] sm:$0xf] %vm358, %v330
        %364 = vst.msk [vmem:[%s213 + $0x14] sm:$0xf] %vm358, %v331
        %365 = vst.msk [vmem:[%s213 + $0x18] sm:$0xf] %vm358, %v332
        %366 = vst.msk [vmem:[%s213 + $0x1c] sm:$0xf] %vm358, %v333
        %367 = vst.msk [vmem:[%s213 + $0x20] sm:$0xf] %vm358, %v334
        %368 = vst.msk [vmem:[%s213 + $0x24] sm:$0xf] %vm358, %v335
        %369 = vst.msk [vmem:[%s213 + $0x28] sm:$0xf] %vm358, %v336
        %370 = vst.msk [vmem:[%s213 + $0x2c] sm:$0xf] %vm358, %v337
        %371 = vst.msk [vmem:[%s213 + $0x30] sm:$0xf] %vm358, %v338
        %372 = vst.msk [vmem:[%s213 + $0x34] sm:$0xf] %vm358, %v339
        %373 = vst.msk [vmem:[%s213 + $0x38] sm:$0xf] %vm358, %v340
        %374 = vst.msk [vmem:[%s213 + $0x3c] sm:$0xf] %vm358, %v341
        %s375 = sand.u32 %s97, 1
        %s376 = scalar_lea.sflag [#allocation4], %s375
        %s377 = sand.u32 %s97, 1
        %s378 = smul.addr %s377, 64
        %s379 = scalar_lea.vmem [#allocation8], %s378
        // Predicated region
        $region45: #{res_block_forward.5} parent=31 // pred_check
          %p380 = pneg %p107
        $region46: #{res_block_forward.5} parent=31 // pred_check_branch
          %382 = sbr.rel (%p380) target = $region48
        $region47: #{res_block_forward.5} parent=31 // pred_region
          %s383 = smul.u32 16, %s21
          %s385 = ssub.s32 1024, 1024
          %386 = vsyncadd %s376, %s385
          %s387 = smul.addr %s383, 64
          %s388 = scalar_lea.hbm %s3, %s387
          %s389 = sshll.u32 %s379, 4
          %s390 = int_to_ptr.vmem [resolvable:$true] %s389
          %395 = dma.vmem_to_hbm [thread:$0]  %s390, 1024, %s388, %s376, 64, 64, 4
        $region48: #{res_block_forward.5} parent=31 // pred_fallthru
          _
      $region32: #{res_block_forward.5} parent=5 // pred_fallthru
        _
      %p396 = scmp.le.s32.totalorder 2, %s16
      // Predicated region
      $region49: #{res_block_forward.5} parent=5 // pred_check
        %p397 = pneg %p396
      $region50: #{res_block_forward.5} parent=5 // pred_check_branch
        %399 = sbr.rel (%p397) target = $region52
      $region51: #{res_block_forward.5} parent=5 // pred_region
        %s400 = ssub.s32 %s16, 2
        // Predicated region
        $region53: #{res_block_forward.5} parent=51 // pred_check
          %p401 = pneg %p113
        $region54: #{res_block_forward.5} parent=51 // pred_check_branch
          %403 = sbr.rel (%p401) target = $region56
        $region55: #{res_block_forward.5} parent=51 // pred_region
          %s404 = sand.u32 %s98, 1
          %s405 = scalar_lea.sflag [#allocation4], %s404
          %s406 = sand.u32 %s98, 1
          %s407 = smul.addr %s406, 64
          %s408 = scalar_lea.vmem [#allocation8], %s407
          %409 = dma.done %s405, 1024
        $region56: #{res_block_forward.5} parent=51 // pred_fallthru
          _
      $region52: #{res_block_forward.5} parent=5 // pred_fallthru
        _
    $region6: #{res_block_forward.5} parent=1 // loop_footer
      %s20 = sadd.s32 1, %s16
    $region7: #{res_block_forward.5} parent=1 // loop_footer_branch
      %15 = sbr.rel target = $region3
    $region8: #{res_block_forward.5} parent=1 // loop_exit
      _
    %410 = vsyncpa [#allocation3], 1
    %s411 = scalar_lea.sflag [#allocation3], 1
    %412 = vsyncpa %s411, 1
    %413 = vsyncpa [#allocation6], 1
    %414 = vsyncpa [#allocation4], 1
    %s415 = scalar_lea.sflag [#allocation4], 1
    %416 = vsyncpa %s415, 1

// kernel: res_block_forward.4
$region0: #{res_block_forward.4}
  #allocation0 [shape = 'u32[]', space=smem, size = 0x4, offset = 0x4, fixed_abs, tag = 'smem constant byte address 0x4 - core index']
  #allocation1 [shape = 'u32[144,128]{1,0:T(1,128)}', space=vmem, size = 0x12000, scoped, tag = 'internal scratch']
  %s0 = inlined_call_operand.hbm [shape: bf16[512,36], index: 0, kind: input, shape index: {}]
  %s1 = inlined_call_operand.hbm [shape: bf16[36,4], index: 1, kind: input, shape index: {}]
  %s2 = inlined_call_operand.hbm [shape: f32[512,4], index: 2, kind: output, shape index: {0}]
  %s3 = inlined_call_operand.hbm [shape: f32[4,1,4], index: 3, kind: output, shape index: {1}]
  %s4 = inlined_call_operand.hbm [shape: f32[4,1,4], index: 4, kind: output, shape index: {2}]
  %5 = xla_tuple %s2, %s3, %s4
  %s6 = sld [smem:[#allocation0]]
  $region65: #{res_block_forward.4} parent=0
    _
  %s8 = ssub.s32 1, %s6
  %s9 = scalar_select 0, %s8, %s6
  $region1: #{res_block_forward.4} parent=0
    #allocation2 [shape = 'u8[65536]{0}', space=vmem, size = 0x10000, scoped, tag = 'input window, operand 0']
    #allocation3 [shape = 's32[2]{0}', space=sflag, size = 0x8, scoped, tag = 'scoped memory for res_block_forward.4']
    #allocation4 [shape = 's32[2]{0}', space=sflag, size = 0x8, scoped, tag = 'scoped memory for res_block_forward.4']
    #allocation5 [shape = 'u8[10240]{0}', space=vmem, size = 0x2800, scoped, tag = 'input window, operand 1, single buffered']
    #allocation6 [shape = 's32[1]{0}', space=sflag, size = 0x4, scoped, tag = 'scoped memory for res_block_forward.4']
    #allocation7 [shape = 'u8[131072]{0}', space=vmem, size = 0x20000, scoped, tag = 'output window, operand 0']
    #allocation8 [shape = 'u8[1024]{0}', space=vmem, size = 0x400, scoped, tag = 'output window, operand 1']
    #allocation9 [shape = 's32[2]{0}', space=sflag, size = 0x8, scoped, tag = 'scoped memory for res_block_forward.4']
    #allocation10 [shape = 'u8[1024]{0}', space=vmem, size = 0x400, scoped, tag = 'output window, operand 2']
    %10 = vsyncpa [#allocation3], 0
    %s11 = scalar_lea.sflag [#allocation3], 1
    %12 = vsyncpa %s11, 0
    %13 = vsyncpa [#allocation6], 0
    %14 = vsyncpa [#allocation4], 0
    %s15 = scalar_lea.sflag [#allocation4], 1
    %16 = vsyncpa %s15, 0
    %17 = vsyncpa [#allocation9], 0
    %s18 = scalar_lea.sflag [#allocation9], 1
    %19 = vsyncpa %s18, 0
    loop: start=0, step=1, limit=6
    $region2: #{res_block_forward.4} parent=1 // loop_pre_header
      _
    $region3: #{res_block_forward.4} parent=1 // loop_header
      %s21 = sphi 0, %s25
      %p22 = scmp.ge.s32.totalorder %s21, 6
      %s31 = sphi 0, %s33
      %s34 = sphi 0, %s31
      %s35 = sphi 0, %s34
      %s51 = sphi 0, %s35
      %s55 = sphi 0, %s55
      %s57 = sphi 0, %s55
      %s58 = sphi 0, %s57
      %s72 = sphi 0, %s58
      %s78 = sphi 0, %s80
      %s81 = sphi 0, %s78
      %s82 = sphi 0, %s81
      %s98 = sphi 0, %s82
      %s104 = sphi 0, %s106
      %s107 = sphi 0, %s104
      %s108 = sphi 0, %s107
      %s124 = sphi 0, %s108
      %s130 = sphi 0, %s132
      %s133 = sphi 0, %s130
      %s134 = sphi 0, %s133
      %s150 = sphi 0, %s134
    $region4: #{res_block_forward.4} parent=1 // loop_header_branch
      %24 = sbr.rel (%p22) target = $region8
    $region5: #{res_block_forward.4} parent=1 // loop_body
      %s26 = ssub.s32 %s21, 1
      %s27 = ssub.s32 %s21, 2
      %s28 = sadd.s32 %s21, 1
      %s29 = ssub.s32 %s21, %s28
      %p30 = scmp.eq.s32.totalorder %s29, 0
      %s32 = sadd.s32 %s31, 1
      %s33 = scalar_select %p30, %s31, %s32
      %p36 = pneg %p30
      %p37 = scmp.eq.s32.totalorder %s21, 3
      %p38 = por %p36, %p37
      %p39 = scmp.ne.s32.totalorder %s31, %s34
      %p40 = scmp.eq.s32.totalorder %s21, 0
      %p41 = por %p39, %p40
      %p42 = scmp.ne.s32.totalorder %s31, %s34
      %p43 = scmp.eq.s32.totalorder %s26, 3
      %p44 = por %p42, %p43
      %p45 = scmp.ne.s32.totalorder %s34, %s35
      %p46 = scmp.eq.s32.totalorder %s26, 0
      %p47 = por %p45, %p46
      %p48 = scmp.ne.s32.totalorder %s34, %s35
      %p49 = scmp.eq.s32.totalorder %s27, 3
      %p50 = por %p48, %p49
      %p52 = scmp.ne.s32.totalorder %s35, %s51
      %p53 = scmp.eq.s32.totalorder %s27, 0
      %p54 = por %p52, %p53
      %s56 = sadd.s32 %s55, 1
      %p59 = scmp.eq.s32.totalorder %s21, 3
      %p60 = scmp.ne.s32.totalorder %s55, %s57
      %p61 = scmp.eq.s32.totalorder %s21, 0
      %p62 = por %p60, %p61
      %p63 = scmp.ne.s32.totalorder %s55, %s57
      %p64 = scmp.eq.s32.totalorder %s26, 3
      %p65 = por %p63, %p64
      %p66 = scmp.ne.s32.totalorder %s57, %s58
      %p67 = scmp.eq.s32.totalorder %s26, 0
      %p68 = por %p66, %p67
      %p69 = scmp.ne.s32.totalorder %s57, %s58
      %p70 = scmp.eq.s32.totalorder %s27, 3
      %p71 = por %p69, %p70
      %p73 = scmp.ne.s32.totalorder %s58, %s72
      %p74 = scmp.eq.s32.totalorder %s27, 0
      %p75 = por %p73, %p74
      %s76 = ssub.s32 %s21, %s28
      %p77 = scmp.eq.s32.totalorder %s76, 0
      %s79 = sadd.s32 %s78, 1
      %s80 = scalar_select %p77, %s78, %s79
      %p83 = pneg %p77
      %p84 = scmp.eq.s32.totalorder %s21, 3
      %p85 = por %p83, %p84
      %p86 = scmp.ne.s32.totalorder %s78, %s81
      %p87 = scmp.eq.s32.totalorder %s21, 0
      %p88 = por %p86, %p87
      %p89 = scmp.ne.s32.totalorder %s78, %s81
      %p90 = scmp.eq.s32.totalorder %s26, 3
      %p91 = por %p89, %p90
      %p92 = scmp.ne.s32.totalorder %s81, %s82
      %p93 = scmp.eq.s32.totalorder %s26, 0
      %p94 = por %p92, %p93
      %p95 = scmp.ne.s32.totalorder %s81, %s82
      %p96 = scmp.eq.s32.totalorder %s27, 3
      %p97 = por %p95, %p96
      %p99 = scmp.ne.s32.totalorder %s82, %s98
      %p100 = scmp.eq.s32.totalorder %s27, 0
      %p101 = por %p99, %p100
      %s102 = ssub.s32 %s21, %s28
      %p103 = scmp.eq.s32.totalorder %s102, 0
      %s105 = sadd.s32 %s104, 1
      %s106 = scalar_select %p103, %s104, %s105
      %p109 = pneg %p103
      %p110 = scmp.eq.s32.totalorder %s21, 3
      %p111 = por %p109, %p110
      %p112 = scmp.ne.s32.totalorder %s104, %s107
      %p113 = scmp.eq.s32.totalorder %s21, 0
      %p114 = por %p112, %p113
      %p115 = scmp.ne.s32.totalorder %s104, %s107
      %p116 = scmp.eq.s32.totalorder %s26, 3
      %p117 = por %p115, %p116
      %p118 = scmp.ne.s32.totalorder %s107, %s108
      %p119 = scmp.eq.s32.totalorder %s26, 0
      %p120 = por %p118, %p119
      %p121 = scmp.ne.s32.totalorder %s107, %s108
      %p122 = scmp.eq.s32.totalorder %s27, 3
      %p123 = por %p121, %p122
      %p125 = scmp.ne.s32.totalorder %s108, %s124
      %p126 = scmp.eq.s32.totalorder %s27, 0
      %p127 = por %p125, %p126
      %s128 = ssub.s32 %s21, %s28
      %p129 = scmp.eq.s32.totalorder %s128, 0
      %s131 = sadd.s32 %s130, 1
      %s132 = scalar_select %p129, %s130, %s131
      %p135 = pneg %p129
      %p136 = scmp.eq.s32.totalorder %s21, 3
      %p137 = por %p135, %p136
      %p138 = scmp.ne.s32.totalorder %s130, %s133
      %p139 = scmp.eq.s32.totalorder %s21, 0
      %p140 = por %p138, %p139
      %p141 = scmp.ne.s32.totalorder %s130, %s133
      %p142 = scmp.eq.s32.totalorder %s26, 3
      %p143 = por %p141, %p142
      %p144 = scmp.ne.s32.totalorder %s133, %s134
      %p145 = scmp.eq.s32.totalorder %s26, 0
      %p146 = por %p144, %p145
      %p147 = scmp.ne.s32.totalorder %s133, %s134
      %p148 = scmp.eq.s32.totalorder %s27, 3
      %p149 = por %p147, %p148
      %p151 = scmp.ne.s32.totalorder %s134, %s150
      %p152 = scmp.eq.s32.totalorder %s27, 0
      %p153 = por %p151, %p152
      %p154 = scmp.le.s32.totalorder 1, %s21
      %p155 = scmp.lt.s32.totalorder %s21, 5
      %p156 = pnand %p154, %p155
      %p157 = pneg %p156
      // Predicated region
      $region9: #{res_block_forward.4} parent=5 // pred_check
        _
      $region10: #{res_block_forward.4} parent=5 // pred_check_branch
        %159 = sbr.rel (%p156) target = $region12
      $region11: #{res_block_forward.4} parent=5 // pred_region
        %s160 = ssub.s32 %s21, 1
        // Predicated region
        $region13: #{res_block_forward.4} parent=11 // pred_check
          %p161 = pneg %p68
        $region14: #{res_block_forward.4} parent=11 // pred_check_branch
          %163 = sbr.rel (%p161) target = $region16
        $region15: #{res_block_forward.4} parent=11 // pred_region
          %s165 = ssub.s32 320, 320
          %166 = vsyncadd [#allocation6], %s165
          %s167 = sshll.u32 [#allocation5], 4
          %s168 = int_to_ptr.vmem [resolvable:$true] %s167
          %173 = dma.hbm_to_vmem [thread:$0]  %s1, 320, %s168, [#allocation6], 64, 64, 4
        $region16: #{res_block_forward.4} parent=11 // pred_fallthru
          _
      $region12: #{res_block_forward.4} parent=5 // pred_fallthru
        _
      %p174 = scmp.lt.s32.totalorder %s21, 4
      // Predicated region
      $region17: #{res_block_forward.4} parent=5 // pred_check
        %p175 = pneg %p174
      $region18: #{res_block_forward.4} parent=5 // pred_check_branch
        %177 = sbr.rel (%p175) target = $region20
      $region19: #{res_block_forward.4} parent=5 // pred_region
        // Predicated region
        $region21: #{res_block_forward.4} parent=19 // pred_check
          %p178 = pneg %p41
        $region22: #{res_block_forward.4} parent=19 // pred_check_branch
          %180 = sbr.rel (%p178) target = $region24
        $region23: #{res_block_forward.4} parent=19 // pred_region
          %s181 = sand.u32 %s31, 1
          %s182 = scalar_lea.sflag [#allocation3], %s181
          %s183 = sand.u32 %s31, 1
          %s184 = smul.addr %s183, 64
          %s185 = scalar_lea.vmem [#allocation2], %s184
          %s186 = smul.u32 16, %s21
          %s188 = ssub.s32 1024, 1024
          %189 = vsyncadd %s182, %s188
          %s190 = smul.addr %s186, 64
          %s191 = scalar_lea.hbm %s0, %s190
          %s192 = sshll.u32 %s185, 4
          %s193 = int_to_ptr.vmem [resolvable:$true] %s192
          %198 = dma.hbm_to_vmem [thread:$0]  %s191, 1024, %s193, %s182, 64, 64, 4
        $region24: #{res_block_forward.4} parent=19 // pred_fallthru
          _
      $region20: #{res_block_forward.4} parent=5 // pred_fallthru
        _
      %p199 = scmp.le.s32.totalorder 1, %s21
      %p200 = scmp.lt.s32.totalorder %s21, 5
      %p201 = pnand %p199, %p200
      %p202 = pneg %p201
      // Predicated region
      $region25: #{res_block_forward.4} parent=5 // pred_check
        _
      $region26: #{res_block_forward.4} parent=5 // pred_check_branch
        %204 = sbr.rel (%p201) target = $region28
      $region27: #{res_block_forward.4} parent=5 // pred_region
        %s205 = ssub.s32 %s21, 1
        %s206 = sand.u32 %s34, 1
        %s207 = scalar_lea.sflag [#allocation3], %s206
        %s208 = sand.u32 %s34, 1
        %s209 = smul.addr %s208, 64
        %s210 = scalar_lea.vmem [#allocation2], %s209
        // Predicated region
        $region29: #{res_block_forward.4} parent=27 // pred_check
          %p211 = pneg %p47
        $region30: #{res_block_forward.4} parent=27 // pred_check_branch
          %213 = sbr.rel (%p211) target = $region32
        $region31: #{res_block_forward.4} parent=27 // pred_region
          %214 = dma.done %s207, 1024
        $region32: #{res_block_forward.4} parent=27 // pred_fallthru
          _
        // Predicated region
        $region33: #{res_block_forward.4} parent=27 // pred_check
          %p215 = pneg %p68
        $region34: #{res_block_forward.4} parent=27 // pred_check_branch
          %217 = sbr.rel (%p215) target = $region36
        $region35: #{res_block_forward.4} parent=27 // pred_region
          %218 = dma.done [#allocation6], 320
        $region36: #{res_block_forward.4} parent=27 // pred_fallthru
          _
        %s219 = sand.u32 %s34, 1
        %s220 = scalar_lea.sflag [#allocation3], %s219
        %s221 = sand.u32 %s34, 1
        %s222 = smul.addr %s221, 64
        %s223 = scalar_lea.vmem [#allocation2], %s222
        %p224 = pneg %p47
        %p225 = pneg %p44
        %p226 = pneg %p68
        %p227 = pneg %p65
        %p228 = pneg %p94
        %p229 = pneg %p91
        %s230 = sand.u32 %s81, 1
        %s231 = scalar_lea.sflag [#allocation4], %s230
        %s232 = sand.u32 %s81, 1
        %s233 = smul.addr %s232, 128
        %s234 = scalar_lea.vmem [#allocation7], %s233
        %p235 = pneg %p120
        %p236 = pneg %p117
        %s237 = sand.u32 %s26, 1
        %s238 = scalar_lea.sflag [#allocation9], %s237
        %s239 = sand.u32 %s107, 1
        %s240 = scalar_lea.vmem [#allocation8], %s239
        %p241 = pneg %p146
        %p242 = pneg %p143
        %s243 = sand.u32 %s26, 1
        %s244 = scalar_lea.sflag [#allocation9], %s243
        %s245 = sand.u32 %s133, 1
        %s246 = scalar_lea.vmem [#allocation10], %s245
        %s247 = smul.u32 16, %s26
        %s248 = smul.u32 16, %s26
        %v250 = vld [vmem:[%s210] sm:$0xf]
        %v251 = vld [vmem:[%s210 + $0x4] sm:$0xf]
        %v252 = vld [vmem:[%s210 + $0x8] sm:$0xf]
        %v253 = vld [vmem:[%s210 + $0xc] sm:$0xf]
        %v254 = vld [vmem:[%s210 + $0x10] sm:$0xf]
        %v255 = vld [vmem:[%s210 + $0x14] sm:$0xf]
        %v256 = vld [vmem:[%s210 + $0x18] sm:$0xf]
        %v257 = vld [vmem:[%s210 + $0x1c] sm:$0xf]
        %v258 = vld [vmem:[%s210 + $0x20] sm:$0xf]
        %v259 = vld [vmem:[%s210 + $0x24] sm:$0xf]
        %v260 = vld [vmem:[%s210 + $0x28] sm:$0xf]
        %v261 = vld [vmem:[%s210 + $0x2c] sm:$0xf]
        %v262 = vld [vmem:[%s210 + $0x30] sm:$0xf]
        %v263 = vld [vmem:[%s210 + $0x34] sm:$0xf]
        %v264 = vld [vmem:[%s210 + $0x38] sm:$0xf]
        %v265 = vld [vmem:[%s210 + $0x3c] sm:$0xf]
        %v266 = vld [vmem:[#allocation5] sm:$0xf]
        %v267 = vld [vmem:[#allocation5 + $0x4] sm:$0xf]
        %v268 = vld [vmem:[#allocation5 + $0x8] sm:$0xf]
        %v269 = vld [vmem:[#allocation5 + $0xc] sm:$0xf]
        %v270 = vld [vmem:[#allocation5 + $0x10] sm:$0x3]
        %v287 = vunpack.c.l.b16 %v250
        %v288 = vunpack.c.l.b16 %v251
        %v289 = vunpack.c.l.b16 %v252
        %v290 = vunpack.c.l.b16 %v253
        %v291 = vunpack.c.l.b16 %v254
        %v292 = vunpack.c.l.b16 %v255
        %v293 = vunpack.c.l.b16 %v256
        %v294 = vunpack.c.l.b16 %v257
        %v295 = vunpack.c.l.b16 %v258
        %v296 = vunpack.c.l.b16 %v259
        %v297 = vunpack.c.l.b16 %v260
        %v298 = vunpack.c.l.b16 %v261
        %v299 = vunpack.c.l.b16 %v262
        %v300 = vunpack.c.l.b16 %v263
        %v301 = vunpack.c.l.b16 %v264
        %v302 = vunpack.c.l.b16 %v265
        %v303 = vpack.c.b16 %v288, %v287
        %v304 = vpack.c.b16 %v290, %v289
        %v305 = vpack.c.b16 %v292, %v291
        %v306 = vpack.c.b16 %v294, %v293
        %v307 = vpack.c.b16 %v296, %v295
        %v308 = vpack.c.b16 %v298, %v297
        %v309 = vpack.c.b16 %v300, %v299
        %v310 = vpack.c.b16 %v302, %v301
        %v316 = vunpack.c.l.b16 %v266
        %v317 = vunpack.c.l.b16 %v267
        %v318 = vunpack.c.l.b16 %v268
        %v319 = vunpack.c.l.b16 %v269
        %v320 = vunpack.c.l.b16 %v270
        %v321 = vpack.c.b16 %v317, %v316
        %v322 = vpack.c.b16 %v319, %v318
        %v323 = vpack.c.b16 %v320, %v320
        %vm326 = vcmask 293888
        %v328 = vsel %vm326, %v303, 0
        %v331 = vsel %vm326, %v304, 0
        %v334 = vsel %vm326, %v305, 0
        %v337 = vsel %vm326, %v306, 0
        %v340 = vsel %vm326, %v307, 0
        %v343 = vsel %vm326, %v308, 0
        %v346 = vsel %vm326, %v309, 0
        %v349 = vsel %vm326, %v310, 0
        %vm351 = vcmask 1041408
        %v353 = vsel %vm351, %v323, 0
        %355 = vmatprep.subr.bf16.mxu0 0
        %356 = vmatpush1.bf16.msra.mxu0 %v321
        %357 = vmatprep.subr.bf16.mxu0 0
        %358 = vmatpush1.bf16.msra.mxu0 %v322
        %359 = vmatprep.subr.bf16.mxu0 0
        %360 = vmatpush1.bf16.msra.mxu0 %v353
        %361 = vmatprep.subr.bf16.mxu0 0
        %362 = vmatpush1.bf16.msra.mxu0 0
        %363 = vmatprep.subr.bf16.mxu0 0
        %364 = vmatpush1.bf16.msra.mxu0 0
        %365 = vmatprep.subr.bf16.mxu0 0
        %366 = vmatpush1.bf16.msra.mxu0 0
        %367 = vmatprep.subr.bf16.mxu0 0
        %368 = vmatpush1.bf16.msra.mxu0 0
        %369 = vmatprep.subr.bf16.mxu0 0
        %370 = vmatpush1.bf16.msra.mxu0 0
        %371 = vmatprep.subr.bf16.mxu0 0
        %372 = vmatpush1.bf16.msra.mxu0 0
        %373 = vmatprep.subr.bf16.mxu0 0
        %374 = vmatpush1.bf16.msra.mxu0 0
        %375 = vmatprep.subr.bf16.mxu0 0
        %376 = vmatpush1.bf16.msra.mxu0 0
        %377 = vmatprep.subr.bf16.mxu0 0
        %378 = vmatpush1.bf16.msra.mxu0 0
        %379 = vmatprep.subr.bf16.mxu0 0
        %380 = vmatpush1.bf16.msra.mxu0 0
        %381 = vmatprep.subr.bf16.mxu0 0
        %382 = vmatpush1.bf16.msra.mxu0 0
        %383 = vmatprep.subr.bf16.mxu0 0
        %384 = vmatpush1.bf16.msra.mxu0 0
        %385 = vmatprep.subr.bf16.mxu0 0
        %386 = vmatpush1.bf16.msra.mxu0 0
        %387 = vmatprep.mubr.bf16.mxu0 0
        %388 = vmatmul.mubr.bf16.gmra.mrb[0].mxu0 %v328
        %v389 = vpop.f32.mrb[0].mxu0
        %v390 = vadd.f32 0.0, %v389
        %v391 = vpop.f32.mrb[0].mxu0
        %v392 = vpop.f32.mrb[0].mxu0
        %v393 = vadd.f32 0.0, %v392
        %v394 = vpop.f32.mrb[0].mxu0
        %395 = vmatprep.mubr.bf16.mxu0 0
        %396 = vmatmul.mubr.bf16.gmra.mrb[0].mxu0 %v331
        %v397 = vpop.f32.mrb[0].mxu0
        %v398 = vadd.f32 0.0, %v397
        %v399 = vpop.f32.mrb[0].mxu0
        %v400 = vpop.f32.mrb[0].mxu0
        %v401 = vadd.f32 0.0, %v400
        %v402 = vpop.f32.mrb[0].mxu0
        %403 = vmatprep.mubr.bf16.mxu0 0
        %404 = vmatmul.mubr.bf16.gmra.mrb[0].mxu0 %v334
        %v405 = vpop.f32.mrb[0].mxu0
        %v406 = vadd.f32 0.0, %v405
        %v407 = vpop.f32.mrb[0].mxu0
        %v408 = vpop.f32.mrb[0].mxu0
        %v409 = vadd.f32 0.0, %v408
        %v410 = vpop.f32.mrb[0].mxu0
        %411 = vmatprep.mubr.bf16.mxu0 0
        %412 = vmatmul.mubr.bf16.gmra.mrb[0].mxu0 %v337
        %v413 = vpop.f32.mrb[0].mxu0
        %v414 = vadd.f32 0.0, %v413
        %v415 = vpop.f32.mrb[0].mxu0
        %v416 = vpop.f32.mrb[0].mxu0
        %v417 = vadd.f32 0.0, %v416
        %v418 = vpop.f32.mrb[0].mxu0
        %419 = vmatprep.mubr.bf16.mxu0 0
        %420 = vmatmul.mubr.bf16.gmra.mrb[0].mxu0 %v340
        %v421 = vpop.f32.mrb[0].mxu0
        %v422 = vadd.f32 0.0, %v421
        %v423 = vpop.f32.mrb[0].mxu0
        %v424 = vpop.f32.mrb[0].mxu0
        %v425 = vadd.f32 0.0, %v424
        %v426 = vpop.f32.mrb[0].mxu0
        %427 = vmatprep.mubr.bf16.mxu0 0
        %428 = vmatmul.mubr.bf16.gmra.mrb[0].mxu0 %v343
        %v429 = vpop.f32.mrb[0].mxu0
        %v430 = vadd.f32 0.0, %v429
        %v431 = vpop.f32.mrb[0].mxu0
        %v432 = vpop.f32.mrb[0].mxu0
        %v433 = vadd.f32 0.0, %v432
        %v434 = vpop.f32.mrb[0].mxu0
        %435 = vmatprep.mubr.bf16.mxu0 0
        %436 = vmatmul.mubr.bf16.gmra.mrb[0].mxu0 %v346
        %v437 = vpop.f32.mrb[0].mxu0
        %v438 = vadd.f32 0.0, %v437
        %v439 = vpop.f32.mrb[0].mxu0
        %v440 = vpop.f32.mrb[0].mxu0
        %v441 = vadd.f32 0.0, %v440
        %v442 = vpop.f32.mrb[0].mxu0
        %443 = vmatprep.mubr.bf16.mxu0 0
        %444 = vmatmul.mubr.bf16.gmra.mrb[0].mxu0 %v349
        %v445 = vpop.f32.mrb[0].mxu0
        %v446 = vadd.f32 0.0, %v445
        %v447 = vpop.f32.mrb[0].mxu0
        %v448 = vpop.f32.mrb[0].mxu0
        %v449 = vadd.f32 0.0, %v448
        %v450 = vpop.f32.mrb[0].mxu0
        %451 = vdwg.mxu0
        %vm452 = vcmask 31744
        %453 = vst.msk [vmem:[%s234] sm:$0xff] %vm452, %v390
        %454 = vst.msk [vmem:[%s234 + $0x8] sm:$0xff] %vm452, %v393
        %455 = vst.msk [vmem:[%s234 + $0x10] sm:$0xff] %vm452, %v398
        %456 = vst.msk [vmem:[%s234 + $0x18] sm:$0xff] %vm452, %v401
        %457 = vst.msk [vmem:[%s234 + $0x20] sm:$0xff] %vm452, %v406
        %458 = vst.msk [vmem:[%s234 + $0x28] sm:$0xff] %vm452, %v409
        %459 = vst.msk [vmem:[%s234 + $0x30] sm:$0xff] %vm452, %v414
        %460 = vst.msk [vmem:[%s234 + $0x38] sm:$0xff] %vm452, %v417
        %461 = vst.msk [vmem:[%s234 + $0x40] sm:$0xff] %vm452, %v422
        %462 = vst.msk [vmem:[%s234 + $0x48] sm:$0xff] %vm452, %v425
        %463 = vst.msk [vmem:[%s234 + $0x50] sm:$0xff] %vm452, %v430
        %464 = vst.msk [vmem:[%s234 + $0x58] sm:$0xff] %vm452, %v433
        %465 = vst.msk [vmem:[%s234 + $0x60] sm:$0xff] %vm452, %v438
        %466 = vst.msk [vmem:[%s234 + $0x68] sm:$0xff] %vm452, %v441
        %467 = vst.msk [vmem:[%s234 + $0x70] sm:$0xff] %vm452, %v446
        %468 = vst.msk [vmem:[%s234 + $0x78] sm:$0xff] %vm452, %v449
        %v469 = vsel %vm452, %v390, 0.0
        %v470 = vsel %vm452, %v393, 0.0
        %v471 = vadd.f32 %v469, %v470
        %v472 = vsel %vm452, %v398, 0.0
        %v473 = vadd.f32 %v471, %v472
        %v474 = vsel %vm452, %v401, 0.0
        %v475 = vadd.f32 %v473, %v474
        %v476 = vsel %vm452, %v406, 0.0
        %v477 = vadd.f32 %v475, %v476
        %v478 = vsel %vm452, %v409, 0.0
        %v479 = vadd.f32 %v477, %v478
        %v480 = vsel %vm452, %v414, 0.0
        %v481 = vadd.f32 %v479, %v480
        %v482 = vsel %vm452, %v417, 0.0
        %v483 = vadd.f32 %v481, %v482
        %v484 = vsel %vm452, %v422, 0.0
        %v485 = vadd.f32 %v483, %v484
        %v486 = vsel %vm452, %v425, 0.0
        %v487 = vadd.f32 %v485, %v486
        %v488 = vsel %vm452, %v430, 0.0
        %v489 = vadd.f32 %v487, %v488
        %v490 = vsel %vm452, %v433, 0.0
        %v491 = vadd.f32 %v489, %v490
        %v492 = vsel %vm452, %v438, 0.0
        %v493 = vadd.f32 %v491, %v492
        %v494 = vsel %vm452, %v441, 0.0
        %v495 = vadd.f32 %v493, %v494
        %v496 = vsel %vm452, %v446, 0.0
        %v497 = vadd.f32 %v495, %v496
        %v498 = vsel %vm452, %v449, 0.0
        %v499 = vadd.f32 %v497, %v498
        %v500 = vrot.slane %v499, 4
        %v501 = vadd.f32 %v499, %v500
        %v502 = vrot.slane %v501, 2
        %v503 = vadd.f32 %v501, %v502
        %v504 = vrot.slane %v503, 1
        %v505 = vadd.f32 %v503, %v504
        %vm506 = vcmask 24576
        %507 = vst.msk [vmem:[%s240] sm:$0x1] %vm506, %v505
        %v508 = vmul.f32 %v390, %v390
        %v509 = vmul.f32 %v393, %v393
        %v510 = vmul.f32 %v398, %v398
        %v511 = vmul.f32 %v401, %v401
        %v512 = vmul.f32 %v406, %v406
        %v513 = vmul.f32 %v409, %v409
        %v514 = vmul.f32 %v414, %v414
        %v515 = vmul.f32 %v417, %v417
        %v516 = vmul.f32 %v422, %v422
        %v517 = vmul.f32 %v425, %v425
        %v518 = vmul.f32 %v430, %v430
        %v519 = vmul.f32 %v433, %v433
        %v520 = vmul.f32 %v438, %v438
        %v521 = vmul.f32 %v441, %v441
        %v522 = vmul.f32 %v446, %v446
        %v523 = vmul.f32 %v449, %v449
        %v524 = vsel %vm452, %v508, 0.0
        %v525 = vsel %vm452, %v509, 0.0
        %v526 = vadd.f32 %v524, %v525
        %v527 = vsel %vm452, %v510, 0.0
        %v528 = vadd.f32 %v526, %v527
        %v529 = vsel %vm452, %v511, 0.0
        %v530 = vadd.f32 %v528, %v529
        %v531 = vsel %vm452, %v512, 0.0
        %v532 = vadd.f32 %v530, %v531
        %v533 = vsel %vm452, %v513, 0.0
        %v534 = vadd.f32 %v532, %v533
        %v535 = vsel %vm452, %v514, 0.0
        %v536 = vadd.f32 %v534, %v535
        %v537 = vsel %vm452, %v515, 0.0
        %v538 = vadd.f32 %v536, %v537
        %v539 = vsel %vm452, %v516, 0.0
        %v540 = vadd.f32 %v538, %v539
        %v541 = vsel %vm452, %v517, 0.0
        %v542 = vadd.f32 %v540, %v541
        %v543 = vsel %vm452, %v518, 0.0
        %v544 = vadd.f32 %v542, %v543
        %v545 = vsel %vm452, %v519, 0.0
        %v546 = vadd.f32 %v544, %v545
        %v547 = vsel %vm452, %v520, 0.0
        %v548 = vadd.f32 %v546, %v547
        %v549 = vsel %vm452, %v521, 0.0
        %v550 = vadd.f32 %v548, %v549
        %v551 = vsel %vm452, %v522, 0.0
        %v552 = vadd.f32 %v550, %v551
        %v553 = vsel %vm452, %v523, 0.0
        %v554 = vadd.f32 %v552, %v553
        %v555 = vrot.slane %v554, 4
        %v556 = vadd.f32 %v554, %v555
        %v557 = vrot.slane %v556, 2
        %v558 = vadd.f32 %v556, %v557
        %v559 = vrot.slane %v558, 1
        %v560 = vadd.f32 %v558, %v559
        %561 = vst.msk [vmem:[%s246] sm:$0x1] %vm506, %v560
        %s562 = sand.u32 %s81, 1
        %s563 = scalar_lea.sflag [#allocation4], %s562
        %s564 = sand.u32 %s81, 1
        %s565 = smul.addr %s564, 128
        %s566 = scalar_lea.vmem [#allocation7], %s565
        %s567 = sand.u32 %s26, 1
        %s568 = scalar_lea.sflag [#allocation9], %s567
        %s569 = sand.u32 %s107, 1
        %s570 = scalar_lea.vmem [#allocation8], %s569
        %s571 = sand.u32 %s26, 1
        %s572 = scalar_lea.sflag [#allocation9], %s571
        %s573 = sand.u32 %s133, 1
        %s574 = scalar_lea.vmem [#allocation10], %s573
        // Predicated region
        $region37: #{res_block_forward.4} parent=27 // pred_check
          %p575 = pneg %p91
        $region38: #{res_block_forward.4} parent=27 // pred_check_branch
          %577 = sbr.rel (%p575) target = $region40
        $region39: #{res_block_forward.4} parent=27 // pred_region
          %s578 = smul.u32 16, %s26
          %s580 = ssub.s32 2048, 2048
          %581 = vsyncadd %s563, %s580
          %s582 = smul.addr %s578, 128
          %s583 = scalar_lea.hbm %s2, %s582
          %s584 = sshll.u32 %s566, 4
          %s585 = int_to_ptr.vmem [resolvable:$true] %s584
          %590 = dma.vmem_to_hbm [thread:$0]  %s585, 2048, %s583, %s563, 128, 128, 8
        $region40: #{res_block_forward.4} parent=27 // pred_fallthru
          _
        // Predicated region
        $region41: #{res_block_forward.4} parent=27 // pred_check
          %p591 = pneg %p117
        $region42: #{res_block_forward.4} parent=27 // pred_check_branch
          %593 = sbr.rel (%p591) target = $region44
        $region43: #{res_block_forward.4} parent=27 // pred_region
          %s595 = ssub.s32 16, 16
          %596 = vsyncadd %s568, %s595
          %s597 = smul.addr %s26, 16
          %s598 = scalar_lea.hbm %s3, %s597
          %s600 = sshll.u32 %s570, 4
          %s601 = int_to_ptr.vmem [resolvable:$true] %s600
          %603 = dma.vmem_to_hbm [thread:$0]  %s601, 16, %s598, %s568
        $region44: #{res_block_forward.4} parent=27 // pred_fallthru
          _
        // Predicated region
        $region45: #{res_block_forward.4} parent=27 // pred_check
          %p604 = pneg %p143
        $region46: #{res_block_forward.4} parent=27 // pred_check_branch
          %606 = sbr.rel (%p604) target = $region48
        $region47: #{res_block_forward.4} parent=27 // pred_region
          %s608 = ssub.s32 16, 16
          %609 = vsyncadd %s572, %s608
          %s610 = smul.addr %s26, 16
          %s611 = scalar_lea.hbm %s4, %s610
          %s613 = sshll.u32 %s574, 4
          %s614 = int_to_ptr.vmem [resolvable:$true] %s613
          %616 = dma.vmem_to_hbm [thread:$0]  %s614, 16, %s611, %s572
        $region48: #{res_block_forward.4} parent=27 // pred_fallthru
          _
      $region28: #{res_block_forward.4} parent=5 // pred_fallthru
        _
      %p617 = scmp.le.s32.totalorder 2, %s21
      // Predicated region
      $region49: #{res_block_forward.4} parent=5 // pred_check
        %p618 = pneg %p617
      $region50: #{res_block_forward.4} parent=5 // pred_check_branch
        %620 = sbr.rel (%p618) target = $region52
      $region51: #{res_block_forward.4} parent=5 // pred_region
        %s621 = ssub.s32 %s21, 2
        // Predicated region
        $region53: #{res_block_forward.4} parent=51 // pred_check
          %p622 = pneg %p97
        $region54: #{res_block_forward.4} parent=51 // pred_check_branch
          %624 = sbr.rel (%p622) target = $region56
        $region55: #{res_block_forward.4} parent=51 // pred_region
          %s625 = sand.u32 %s82, 1
          %s626 = scalar_lea.sflag [#allocation4], %s625
          %s627 = sand.u32 %s82, 1
          %s628 = smul.addr %s627, 128
          %s629 = scalar_lea.vmem [#allocation7], %s628
          %630 = dma.done %s626, 2048
        $region56: #{res_block_forward.4} parent=51 // pred_fallthru
          _
        // Predicated region
        $region57: #{res_block_forward.4} parent=51 // pred_check
          %p631 = pneg %p123
        $region58: #{res_block_forward.4} parent=51 // pred_check_branch
          %633 = sbr.rel (%p631) target = $region60
        $region59: #{res_block_forward.4} parent=51 // pred_region
          %s634 = sand.u32 %s27, 1
          %s635 = scalar_lea.sflag [#allocation9], %s634
          %s636 = sand.u32 %s108, 1
          %s637 = scalar_lea.vmem [#allocation8], %s636
          %638 = dma.done %s635, 16
        $region60: #{res_block_forward.4} parent=51 // pred_fallthru
          _
        // Predicated region
        $region61: #{res_block_forward.4} parent=51 // pred_check
          %p639 = pneg %p149
        $region62: #{res_block_forward.4} parent=51 // pred_check_branch
          %641 = sbr.rel (%p639) target = $region64
        $region63: #{res_block_forward.4} parent=51 // pred_region
          %s642 = sand.u32 %s27, 1
          %s643 = scalar_lea.sflag [#allocation9], %s642
          %s644 = sand.u32 %s134, 1
          %s645 = scalar_lea.vmem [#allocation10], %s644
          %646 = dma.done %s643, 16
        $region64: #{res_block_forward.4} parent=51 // pred_fallthru
          _
      $region52: #{res_block_forward.4} parent=5 // pred_fallthru
        _
    $region6: #{res_block_forward.4} parent=1 // loop_footer
      %s25 = sadd.s32 1, %s21
    $region7: #{res_block_forward.4} parent=1 // loop_footer_branch
      %20 = sbr.rel target = $region3
    $region8: #{res_block_forward.4} parent=1 // loop_exit
      _
    %647 = vsyncpa [#allocation3], 1
    %s648 = scalar_lea.sflag [#allocation3], 1
    %649 = vsyncpa %s648, 1
    %650 = vsyncpa [#allocation6], 1
    %651 = vsyncpa [#allocation4], 1
    %s652 = scalar_lea.sflag [#allocation4], 1
    %653 = vsyncpa %s652, 1
    %654 = vsyncpa [#allocation9], 1
    %s655 = scalar_lea.sflag [#allocation9], 1
    %656 = vsyncpa %s655, 1

// kernel: res_block_forward.7
$region0: #{res_block_forward.7}
  #allocation0 [shape = 'u32[]', space=smem, size = 0x4, offset = 0x4, fixed_abs, tag = 'smem constant byte address 0x4 - core index']
  #allocation1 [shape = 'u32[144,128]{1,0:T(1,128)}', space=vmem, size = 0x12000, scoped, tag = 'internal scratch']
  %s0 = inlined_call_operand.hbm [shape: f32[512,4], index: 0, kind: input, shape index: {}]
  %s1 = inlined_call_operand.hbm [shape: f32[1,4], index: 1, kind: input, shape index: {}]
  %s2 = inlined_call_operand.hbm [shape: f32[1,4], index: 2, kind: input, shape index: {}]
  %s3 = inlined_call_operand.hbm [shape: f32[512,4], index: 3, kind: input, shape index: {}]
  %s4 = inlined_call_operand.hbm [shape: f32[512,4], index: 4, kind: output, shape index: {}]
  %s5 = sld [smem:[#allocation0]]
  $region65: #{res_block_forward.7} parent=0
    _
  %s7 = ssub.s32 1, %s5
  %s8 = scalar_select 0, %s7, %s5
  $region1: #{res_block_forward.7} parent=0
    #allocation2 [shape = 'u8[131072]{0}', space=vmem, size = 0x20000, scoped, tag = 'input window, operand 0']
    #allocation3 [shape = 's32[2]{0}', space=sflag, size = 0x8, scoped, tag = 'scoped memory for res_block_forward.7']
    #allocation4 [shape = 's32[2]{0}', space=sflag, size = 0x8, scoped, tag = 'scoped memory for res_block_forward.7']
    #allocation5 [shape = 'u8[512]{0}', space=vmem, size = 0x400, scoped, tag = 'input window, operand 1, single buffered']
    #allocation6 [shape = 's32[1]{0}', space=sflag, size = 0x4, scoped, tag = 'scoped memory for res_block_forward.7']
    #allocation7 [shape = 'u8[512]{0}', space=vmem, size = 0x400, scoped, tag = 'input window, operand 2, single buffered']
    #allocation8 [shape = 'u8[131072]{0}', space=vmem, size = 0x20000, scoped, tag = 'input window, operand 3']
    #allocation9 [shape = 's32[2]{0}', space=sflag, size = 0x8, scoped, tag = 'scoped memory for res_block_forward.7']
    #allocation10 [shape = 'u8[131072]{0}', space=vmem, size = 0x20000, scoped, tag = 'output window, operand 0']
    %9 = vsyncpa [#allocation3], 0
    %s10 = scalar_lea.sflag [#allocation3], 1
    %11 = vsyncpa %s10, 0
    %12 = vsyncpa [#allocation6], 0
    %13 = vsyncpa [#allocation9], 0
    %s14 = scalar_lea.sflag [#allocation9], 1
    %15 = vsyncpa %s14, 0
    %16 = vsyncpa [#allocation4], 0
    %s17 = scalar_lea.sflag [#allocation4], 1
    %18 = vsyncpa %s17, 0
    loop: start=0, step=1, limit=6
    $region2: #{res_block_forward.7} parent=1 // loop_pre_header
      _
    $region3: #{res_block_forward.7} parent=1 // loop_header
      %s20 = sphi 0, %s24
      %p21 = scmp.ge.s32.totalorder %s20, 6
      %s30 = sphi 0, %s32
      %s33 = sphi 0, %s30
      %s34 = sphi 0, %s33
      %s50 = sphi 0, %s34
      %s54 = sphi 0, %s54
      %s56 = sphi 0, %s54
      %s57 = sphi 0, %s56
      %s71 = sphi 0, %s57
      %s75 = sphi 0, %s75
      %s77 = sphi 0, %s75
      %s78 = sphi 0, %s77
      %s92 = sphi 0, %s78
      %s98 = sphi 0, %s100
      %s101 = sphi 0, %s98
      %s102 = sphi 0, %s101
      %s118 = sphi 0, %s102
      %s124 = sphi 0, %s126
      %s127 = sphi 0, %s124
      %s128 = sphi 0, %s127
      %s144 = sphi 0, %s128
    $region4: #{res_block_forward.7} parent=1 // loop_header_branch
      %23 = sbr.rel (%p21) target = $region8
    $region5: #{res_block_forward.7} parent=1 // loop_body
      %s25 = ssub.s32 %s20, 1
      %s26 = ssub.s32 %s20, 2
      %s27 = sadd.s32 %s20, 1
      %s28 = ssub.s32 %s20, %s27
      %p29 = scmp.eq.s32.totalorder %s28, 0
      %s31 = sadd.s32 %s30, 1
      %s32 = scalar_select %p29, %s30, %s31
      %p35 = pneg %p29
      %p36 = scmp.eq.s32.totalorder %s20, 3
      %p37 = por %p35, %p36
      %p38 = scmp.ne.s32.totalorder %s30, %s33
      %p39 = scmp.eq.s32.totalorder %s20, 0
      %p40 = por %p38, %p39
      %p41 = scmp.ne.s32.totalorder %s30, %s33
      %p42 = scmp.eq.s32.totalorder %s25, 3
      %p43 = por %p41, %p42
      %p44 = scmp.ne.s32.totalorder %s33, %s34
      %p45 = scmp.eq.s32.totalorder %s25, 0
      %p46 = por %p44, %p45
      %p47 = scmp.ne.s32.totalorder %s33, %s34
      %p48 = scmp.eq.s32.totalorder %s26, 3
      %p49 = por %p47, %p48
      %p51 = scmp.ne.s32.totalorder %s34, %s50
      %p52 = scmp.eq.s32.totalorder %s26, 0
      %p53 = por %p51, %p52
      %s55 = sadd.s32 %s54, 1
      %p58 = scmp.eq.s32.totalorder %s20, 3
      %p59 = scmp.ne.s32.totalorder %s54, %s56
      %p60 = scmp.eq.s32.totalorder %s20, 0
      %p61 = por %p59, %p60
      %p62 = scmp.ne.s32.totalorder %s54, %s56
      %p63 = scmp.eq.s32.totalorder %s25, 3
      %p64 = por %p62, %p63
      %p65 = scmp.ne.s32.totalorder %s56, %s57
      %p66 = scmp.eq.s32.totalorder %s25, 0
      %p67 = por %p65, %p66
      %p68 = scmp.ne.s32.totalorder %s56, %s57
      %p69 = scmp.eq.s32.totalorder %s26, 3
      %p70 = por %p68, %p69
      %p72 = scmp.ne.s32.totalorder %s57, %s71
      %p73 = scmp.eq.s32.totalorder %s26, 0
      %p74 = por %p72, %p73
      %s76 = sadd.s32 %s75, 1
      %p79 = scmp.eq.s32.totalorder %s20, 3
      %p80 = scmp.ne.s32.totalorder %s75, %s77
      %p81 = scmp.eq.s32.totalorder %s20, 0
      %p82 = por %p80, %p81
      %p83 = scmp.ne.s32.totalorder %s75, %s77
      %p84 = scmp.eq.s32.totalorder %s25, 3
      %p85 = por %p83, %p84
      %p86 = scmp.ne.s32.totalorder %s77, %s78
      %p87 = scmp.eq.s32.totalorder %s25, 0
      %p88 = por %p86, %p87
      %p89 = scmp.ne.s32.totalorder %s77, %s78
      %p90 = scmp.eq.s32.totalorder %s26, 3
      %p91 = por %p89, %p90
      %p93 = scmp.ne.s32.totalorder %s78, %s92
      %p94 = scmp.eq.s32.totalorder %s26, 0
      %p95 = por %p93, %p94
      %s96 = ssub.s32 %s20, %s27
      %p97 = scmp.eq.s32.totalorder %s96, 0
      %s99 = sadd.s32 %s98, 1
      %s100 = scalar_select %p97, %s98, %s99
      %p103 = pneg %p97
      %p104 = scmp.eq.s32.totalorder %s20, 3
      %p105 = por %p103, %p104
      %p106 = scmp.ne.s32.totalorder %s98, %s101
      %p107 = scmp.eq.s32.totalorder %s20, 0
      %p108 = por %p106, %p107
      %p109 = scmp.ne.s32.totalorder %s98, %s101
      %p110 = scmp.eq.s32.totalorder %s25, 3
      %p111 = por %p109, %p110
      %p112 = scmp.ne.s32.totalorder %s101, %s102
      %p113 = scmp.eq.s32.totalorder %s25, 0
      %p114 = por %p112, %p113
      %p115 = scmp.ne.s32.totalorder %s101, %s102
      %p116 = scmp.eq.s32.totalorder %s26, 3
      %p117 = por %p115, %p116
      %p119 = scmp.ne.s32.totalorder %s102, %s118
      %p120 = scmp.eq.s32.totalorder %s26, 0
      %p121 = por %p119, %p120
      %s122 = ssub.s32 %s20, %s27
      %p123 = scmp.eq.s32.totalorder %s122, 0
      %s125 = sadd.s32 %s124, 1
      %s126 = scalar_select %p123, %s124, %s125
      %p129 = pneg %p123
      %p130 = scmp.eq.s32.totalorder %s20, 3
      %p131 = por %p129, %p130
      %p132 = scmp.ne.s32.totalorder %s124, %s127
      %p133 = scmp.eq.s32.totalorder %s20, 0
      %p134 = por %p132, %p133
      %p135 = scmp.ne.s32.totalorder %s124, %s127
      %p136 = scmp.eq.s32.totalorder %s25, 3
      %p137 = por %p135, %p136
      %p138 = scmp.ne.s32.totalorder %s127, %s128
      %p139 = scmp.eq.s32.totalorder %s25, 0
      %p140 = por %p138, %p139
      %p141 = scmp.ne.s32.totalorder %s127, %s128
      %p142 = scmp.eq.s32.totalorder %s26, 3
      %p143 = por %p141, %p142
      %p145 = scmp.ne.s32.totalorder %s128, %s144
      %p146 = scmp.eq.s32.totalorder %s26, 0
      %p147 = por %p145, %p146
      %p148 = scmp.le.s32.totalorder 1, %s20
      %p149 = scmp.lt.s32.totalorder %s20, 5
      %p150 = pnand %p148, %p149
      %p151 = pneg %p150
      // Predicated region
      $region9: #{res_block_forward.7} parent=5 // pred_check
        _
      $region10: #{res_block_forward.7} parent=5 // pred_check_branch
        %153 = sbr.rel (%p150) target = $region12
      $region11: #{res_block_forward.7} parent=5 // pred_region
        %s154 = ssub.s32 %s20, 1
        // Predicated region
        $region13: #{res_block_forward.7} parent=11 // pred_check
          %p155 = pneg %p67
        $region14: #{res_block_forward.7} parent=11 // pred_check_branch
          %157 = sbr.rel (%p155) target = $region16
        $region15: #{res_block_forward.7} parent=11 // pred_region
          %s159 = ssub.s32 16, 16
          %160 = vsyncadd [#allocation6], %s159
          %s162 = sshll.u32 [#allocation5], 4
          %s163 = int_to_ptr.vmem [resolvable:$true] %s162
          %165 = dma.hbm_to_vmem [thread:$0]  %s1, 16, %s163, [#allocation6]
        $region16: #{res_block_forward.7} parent=11 // pred_fallthru
          _
        // Predicated region
        $region17: #{res_block_forward.7} parent=11 // pred_check
          %p166 = pneg %p88
        $region18: #{res_block_forward.7} parent=11 // pred_check_branch
          %168 = sbr.rel (%p166) target = $region20
        $region19: #{res_block_forward.7} parent=11 // pred_region
          %s170 = ssub.s32 16, 16
          %171 = vsyncadd [#allocation6], %s170
          %s173 = sshll.u32 [#allocation7], 4
          %s174 = int_to_ptr.vmem [resolvable:$true] %s173
          %176 = dma.hbm_to_vmem [thread:$0]  %s2, 16, %s174, [#allocation6]
        $region20: #{res_block_forward.7} parent=11 // pred_fallthru
          _
      $region12: #{res_block_forward.7} parent=5 // pred_fallthru
        _
      %p177 = scmp.lt.s32.totalorder %s20, 4
      // Predicated region
      $region21: #{res_block_forward.7} parent=5 // pred_check
        %p178 = pneg %p177
      $region22: #{res_block_forward.7} parent=5 // pred_check_branch
        %180 = sbr.rel (%p178) target = $region24
      $region23: #{res_block_forward.7} parent=5 // pred_region
        // Predicated region
        $region25: #{res_block_forward.7} parent=23 // pred_check
          %p181 = pneg %p40
        $region26: #{res_block_forward.7} parent=23 // pred_check_branch
          %183 = sbr.rel (%p181) target = $region28
        $region27: #{res_block_forward.7} parent=23 // pred_region
          %s184 = sand.u32 %s30, 1
          %s185 = scalar_lea.sflag [#allocation3], %s184
          %s186 = sand.u32 %s30, 1
          %s187 = smul.addr %s186, 128
          %s188 = scalar_lea.vmem [#allocation2], %s187
          %s189 = smul.u32 16, %s20
          %s191 = ssub.s32 2048, 2048
          %192 = vsyncadd %s185, %s191
          %s193 = smul.addr %s189, 128
          %s194 = scalar_lea.hbm %s0, %s193
          %s195 = sshll.u32 %s188, 4
          %s196 = int_to_ptr.vmem [resolvable:$true] %s195
          %201 = dma.hbm_to_vmem [thread:$0]  %s194, 2048, %s196, %s185, 128, 128, 8
        $region28: #{res_block_forward.7} parent=23 // pred_fallthru
          _
        // Predicated region
        $region29: #{res_block_forward.7} parent=23 // pred_check
          %p202 = pneg %p108
        $region30: #{res_block_forward.7} parent=23 // pred_check_branch
          %204 = sbr.rel (%p202) target = $region32
        $region31: #{res_block_forward.7} parent=23 // pred_region
          %s205 = sand.u32 %s98, 1
          %s206 = scalar_lea.sflag [#allocation9], %s205
          %s207 = sand.u32 %s98, 1
          %s208 = smul.addr %s207, 128
          %s209 = scalar_lea.vmem [#allocation8], %s208
          %s210 = smul.u32 16, %s20
          %s212 = ssub.s32 2048, 2048
          %213 = vsyncadd %s206, %s212
          %s214 = smul.addr %s210, 128
          %s215 = scalar_lea.hbm %s3, %s214
          %s216 = sshll.u32 %s209, 4
          %s217 = int_to_ptr.vmem [resolvable:$true] %s216
          %222 = dma.hbm_to_vmem [thread:$0]  %s215, 2048, %s217, %s206, 128, 128, 8
        $region32: #{res_block_forward.7} parent=23 // pred_fallthru
          _
      $region24: #{res_block_forward.7} parent=5 // pred_fallthru
        _
      %p223 = scmp.le.s32.totalorder 1, %s20
      %p224 = scmp.lt.s32.totalorder %s20, 5
      %p225 = pnand %p223, %p224
      %p226 = pneg %p225
      // Predicated region
      $region33: #{res_block_forward.7} parent=5 // pred_check
        _
      $region34: #{res_block_forward.7} parent=5 // pred_check_branch
        %228 = sbr.rel (%p225) target = $region36
      $region35: #{res_block_forward.7} parent=5 // pred_region
        %s229 = ssub.s32 %s20, 1
        %s230 = sand.u32 %s33, 1
        %s231 = scalar_lea.sflag [#allocation3], %s230
        %s232 = sand.u32 %s33, 1
        %s233 = smul.addr %s232, 128
        %s234 = scalar_lea.vmem [#allocation2], %s233
        // Predicated region
        $region37: #{res_block_forward.7} parent=35 // pred_check
          %p235 = pneg %p46
        $region38: #{res_block_forward.7} parent=35 // pred_check_branch
          %237 = sbr.rel (%p235) target = $region40
        $region39: #{res_block_forward.7} parent=35 // pred_region
          %238 = dma.done %s231, 2048
        $region40: #{res_block_forward.7} parent=35 // pred_fallthru
          _
        // Predicated region
        $region41: #{res_block_forward.7} parent=35 // pred_check
          %p239 = pneg %p67
        $region42: #{res_block_forward.7} parent=35 // pred_check_branch
          %241 = sbr.rel (%p239) target = $region44
        $region43: #{res_block_forward.7} parent=35 // pred_region
          %242 = dma.done [#allocation6], 16
        $region44: #{res_block_forward.7} parent=35 // pred_fallthru
          _
        // Predicated region
        $region45: #{res_block_forward.7} parent=35 // pred_check
          %p243 = pneg %p88
        $region46: #{res_block_forward.7} parent=35 // pred_check_branch
          %245 = sbr.rel (%p243) target = $region48
        $region47: #{res_block_forward.7} parent=35 // pred_region
          %246 = dma.done [#allocation6], 16
        $region48: #{res_block_forward.7} parent=35 // pred_fallthru
          _
        %s247 = sand.u32 %s101, 1
        %s248 = scalar_lea.sflag [#allocation9], %s247
        %s249 = sand.u32 %s101, 1
        %s250 = smul.addr %s249, 128
        %s251 = scalar_lea.vmem [#allocation8], %s250
        // Predicated region
        $region49: #{res_block_forward.7} parent=35 // pred_check
          %p252 = pneg %p114
        $region50: #{res_block_forward.7} parent=35 // pred_check_branch
          %254 = sbr.rel (%p252) target = $region52
        $region51: #{res_block_forward.7} parent=35 // pred_region
          %255 = dma.done %s248, 2048
        $region52: #{res_block_forward.7} parent=35 // pred_fallthru
          _
        %s256 = sand.u32 %s33, 1
        %s257 = scalar_lea.sflag [#allocation3], %s256
        %s258 = sand.u32 %s33, 1
        %s259 = smul.addr %s258, 128
        %s260 = scalar_lea.vmem [#allocation2], %s259
        %p261 = pneg %p46
        %p262 = pneg %p43
        %p263 = pneg %p67
        %p264 = pneg %p64
        %p265 = pneg %p88
        %p266 = pneg %p85
        %s267 = sand.u32 %s101, 1
        %s268 = scalar_lea.sflag [#allocation9], %s267
        %s269 = sand.u32 %s101, 1
        %s270 = smul.addr %s269, 128
        %s271 = scalar_lea.vmem [#allocation8], %s270
        %p272 = pneg %p114
        %p273 = pneg %p111
        %p274 = pneg %p140
        %p275 = pneg %p137
        %s276 = sand.u32 %s127, 1
        %s277 = scalar_lea.sflag [#allocation4], %s276
        %s278 = sand.u32 %s127, 1
        %s279 = smul.addr %s278, 128
        %s280 = scalar_lea.vmem [#allocation10], %s279
        %s281 = smul.u32 16, %s25
        %s282 = smul.u32 16, %s25
        %s283 = smul.u32 16, %s25
        %v284 = vld [vmem:[%s234] sm:$0xff]
        %v285 = vld [vmem:[%s234 + $0x8] sm:$0xff]
        %v286 = vld [vmem:[%s234 + $0x10] sm:$0xff]
        %v287 = vld [vmem:[%s234 + $0x18] sm:$0xff]
        %v288 = vld [vmem:[%s234 + $0x20] sm:$0xff]
        %v289 = vld [vmem:[%s234 + $0x28] sm:$0xff]
        %v290 = vld [vmem:[%s234 + $0x30] sm:$0xff]
        %v291 = vld [vmem:[%s234 + $0x38] sm:$0xff]
        %v292 = vld [vmem:[%s234 + $0x40] sm:$0xff]
        %v293 = vld [vmem:[%s234 + $0x48] sm:$0xff]
        %v294 = vld [vmem:[%s234 + $0x50] sm:$0xff]
        %v295 = vld [vmem:[%s234 + $0x58] sm:$0xff]
        %v296 = vld [vmem:[%s234 + $0x60] sm:$0xff]
        %v297 = vld [vmem:[%s234 + $0x68] sm:$0xff]
        %v298 = vld [vmem:[%s234 + $0x70] sm:$0xff]
        %v299 = vld [vmem:[%s234 + $0x78] sm:$0xff]
        %v300 = vld [vmem:[#allocation5] sm:$0x1]
        %v302 = vlaneseq
        %v303 = vshrl.u32 %v302, 7
        %v304 = vsub.s32 0, %v303
        %v305 = vrot.slane %v300, %v304
        %v307 = vmul.f32 %v284, %v305
        %v308 = vmul.f32 %v285, %v305
        %v309 = vmul.f32 %v286, %v305
        %v310 = vmul.f32 %v287, %v305
        %v311 = vmul.f32 %v288, %v305
        %v312 = vmul.f32 %v289, %v305
        %v313 = vmul.f32 %v290, %v305
        %v314 = vmul.f32 %v291, %v305
        %v315 = vmul.f32 %v292, %v305
        %v316 = vmul.f32 %v293, %v305
        %v317 = vmul.f32 %v294, %v305
        %v318 = vmul.f32 %v295, %v305
        %v319 = vmul.f32 %v296, %v305
        %v320 = vmul.f32 %v297, %v305
        %v321 = vmul.f32 %v298, %v305
        %v322 = vmul.f32 %v299, %v305
        %v323 = vld [vmem:[#allocation7] sm:$0x1]
        %v325 = vlaneseq
        %v326 = vshrl.u32 %v325, 7
        %v327 = vsub.s32 0, %v326
        %v328 = vrot.slane %v323, %v327
        %v330 = vadd.f32 %v307, %v328
        %v331 = vadd.f32 %v308, %v328
        %v332 = vadd.f32 %v309, %v328
        %v333 = vadd.f32 %v310, %v328
        %v334 = vadd.f32 %v311, %v328
        %v335 = vadd.f32 %v312, %v328
        %v336 = vadd.f32 %v313, %v328
        %v337 = vadd.f32 %v314, %v328
        %v338 = vadd.f32 %v315, %v328
        %v339 = vadd.f32 %v316, %v328
        %v340 = vadd.f32 %v317, %v328
        %v341 = vadd.f32 %v318, %v328
        %v342 = vadd.f32 %v319, %v328
        %v343 = vadd.f32 %v320, %v328
        %v344 = vadd.f32 %v321, %v328
        %v345 = vadd.f32 %v322, %v328
        %v346 = vld [vmem:[%s251] sm:$0xff]
        %v347 = vld [vmem:[%s251 + $0x8] sm:$0xff]
        %v348 = vld [vmem:[%s251 + $0x10] sm:$0xff]
        %v349 = vld [vmem:[%s251 + $0x18] sm:$0xff]
        %v350 = vld [vmem:[%s251 + $0x20] sm:$0xff]
        %v351 = vld [vmem:[%s251 + $0x28] sm:$0xff]
        %v352 = vld [vmem:[%s251 + $0x30] sm:$0xff]
        %v353 = vld [vmem:[%s251 + $0x38] sm:$0xff]
        %v354 = vld [vmem:[%s251 + $0x40] sm:$0xff]
        %v355 = vld [vmem:[%s251 + $0x48] sm:$0xff]
        %v356 = vld [vmem:[%s251 + $0x50] sm:$0xff]
        %v357 = vld [vmem:[%s251 + $0x58] sm:$0xff]
        %v358 = vld [vmem:[%s251 + $0x60] sm:$0xff]
        %v359 = vld [vmem:[%s251 + $0x68] sm:$0xff]
        %v360 = vld [vmem:[%s251 + $0x70] sm:$0xff]
        %v361 = vld [vmem:[%s251 + $0x78] sm:$0xff]
        %v362 = vadd.f32 %v330, %v346
        %v363 = vadd.f32 %v331, %v347
        %v364 = vadd.f32 %v332, %v348
        %v365 = vadd.f32 %v333, %v349
        %v366 = vadd.f32 %v334, %v350
        %v367 = vadd.f32 %v335, %v351
        %v368 = vadd.f32 %v336, %v352
        %v369 = vadd.f32 %v337, %v353
        %v370 = vadd.f32 %v338, %v354
        %v371 = vadd.f32 %v339, %v355
        %v372 = vadd.f32 %v340, %v356
        %v373 = vadd.f32 %v341, %v357
        %v374 = vadd.f32 %v342, %v358
        %v375 = vadd.f32 %v343, %v359
        %v376 = vadd.f32 %v344, %v360
        %v377 = vadd.f32 %v345, %v361
        %v378 = vmax.f32 %v362, 0.0
        %v379 = vmax.f32 %v363, 0.0
        %v380 = vmax.f32 %v364, 0.0
        %v381 = vmax.f32 %v365, 0.0
        %v382 = vmax.f32 %v366, 0.0
        %v383 = vmax.f32 %v367, 0.0
        %v384 = vmax.f32 %v368, 0.0
        %v385 = vmax.f32 %v369, 0.0
        %v386 = vmax.f32 %v370, 0.0
        %v387 = vmax.f32 %v371, 0.0
        %v388 = vmax.f32 %v372, 0.0
        %v389 = vmax.f32 %v373, 0.0
        %v390 = vmax.f32 %v374, 0.0
        %v391 = vmax.f32 %v375, 0.0
        %v392 = vmax.f32 %v376, 0.0
        %v393 = vmax.f32 %v377, 0.0
        %vm394 = vcmask 31744
        %395 = vst.msk [vmem:[%s280] sm:$0xff] %vm394, %v378
        %396 = vst.msk [vmem:[%s280 + $0x8] sm:$0xff] %vm394, %v379
        %397 = vst.msk [vmem:[%s280 + $0x10] sm:$0xff] %vm394, %v380
        %398 = vst.msk [vmem:[%s280 + $0x18] sm:$0xff] %vm394, %v381
        %399 = vst.msk [vmem:[%s280 + $0x20] sm:$0xff] %vm394, %v382
        %400 = vst.msk [vmem:[%s280 + $0x28] sm:$0xff] %vm394, %v383
        %401 = vst.msk [vmem:[%s280 + $0x30] sm:$0xff] %vm394, %v384
        %402 = vst.msk [vmem:[%s280 + $0x38] sm:$0xff] %vm394, %v385
        %403 = vst.msk [vmem:[%s280 + $0x40] sm:$0xff] %vm394, %v386
        %404 = vst.msk [vmem:[%s280 + $0x48] sm:$0xff] %vm394, %v387
        %405 = vst.msk [vmem:[%s280 + $0x50] sm:$0xff] %vm394, %v388
        %406 = vst.msk [vmem:[%s280 + $0x58] sm:$0xff] %vm394, %v389
        %407 = vst.msk [vmem:[%s280 + $0x60] sm:$0xff] %vm394, %v390
        %408 = vst.msk [vmem:[%s280 + $0x68] sm:$0xff] %vm394, %v391
        %409 = vst.msk [vmem:[%s280 + $0x70] sm:$0xff] %vm394, %v392
        %410 = vst.msk [vmem:[%s280 + $0x78] sm:$0xff] %vm394, %v393
        %s411 = sand.u32 %s127, 1
        %s412 = scalar_lea.sflag [#allocation4], %s411
        %s413 = sand.u32 %s127, 1
        %s414 = smul.addr %s413, 128
        %s415 = scalar_lea.vmem [#allocation10], %s414
        // Predicated region
        $region53: #{res_block_forward.7} parent=35 // pred_check
          %p416 = pneg %p137
        $region54: #{res_block_forward.7} parent=35 // pred_check_branch
          %418 = sbr.rel (%p416) target = $region56
        $region55: #{res_block_forward.7} parent=35 // pred_region
          %s419 = smul.u32 16, %s25
          %s421 = ssub.s32 2048, 2048
          %422 = vsyncadd %s412, %s421
          %s423 = smul.addr %s419, 128
          %s424 = scalar_lea.hbm %s4, %s423
          %s425 = sshll.u32 %s415, 4
          %s426 = int_to_ptr.vmem [resolvable:$true] %s425
          %431 = dma.vmem_to_hbm [thread:$0]  %s426, 2048, %s424, %s412, 128, 128, 8
        $region56: #{res_block_forward.7} parent=35 // pred_fallthru
          _
      $region36: #{res_block_forward.7} parent=5 // pred_fallthru
        _
      %p432 = scmp.le.s32.totalorder 2, %s20
      // Predicated region
      $region57: #{res_block_forward.7} parent=5 // pred_check
        %p433 = pneg %p432
      $region58: #{res_block_forward.7} parent=5 // pred_check_branch
        %435 = sbr.rel (%p433) target = $region60
      $region59: #{res_block_forward.7} parent=5 // pred_region
        %s436 = ssub.s32 %s20, 2
        // Predicated region
        $region61: #{res_block_forward.7} parent=59 // pred_check
          %p437 = pneg %p143
        $region62: #{res_block_forward.7} parent=59 // pred_check_branch
          %439 = sbr.rel (%p437) target = $region64
        $region63: #{res_block_forward.7} parent=59 // pred_region
          %s440 = sand.u32 %s128, 1
          %s441 = scalar_lea.sflag [#allocation4], %s440
          %s442 = sand.u32 %s128, 1
          %s443 = smul.addr %s442, 128
          %s444 = scalar_lea.vmem [#allocation10], %s443
          %445 = dma.done %s441, 2048
        $region64: #{res_block_forward.7} parent=59 // pred_fallthru
          _
      $region60: #{res_block_forward.7} parent=5 // pred_fallthru
        _
    $region6: #{res_block_forward.7} parent=1 // loop_footer
      %s24 = sadd.s32 1, %s20
    $region7: #{res_block_forward.7} parent=1 // loop_footer_branch
      %19 = sbr.rel target = $region3
    $region8: #{res_block_forward.7} parent=1 // loop_exit
      _
    %446 = vsyncpa [#allocation3], 1
    %s447 = scalar_lea.sflag [#allocation3], 1
    %448 = vsyncpa %s447, 1
    %449 = vsyncpa [#allocation6], 1
    %450 = vsyncpa [#allocation9], 1
    %s451 = scalar_lea.sflag [#allocation9], 1
    %452 = vsyncpa %s451, 1
    %453 = vsyncpa [#allocation4], 1
    %s454 = scalar_lea.sflag [#allocation4], 1
    %455 = vsyncpa %s454, 1

</llo_original>
